<compile_context>
chip_gen: v7x
topology: tpu7x:2x2x1
jax: 0.10.0
libtpu: 0.0.40
codegen_flags: <defaults>
</compile_context>

<pallas_src>
import functools

import jax
import jax.numpy as jnp
from jax.experimental import pallas as pl
from jax.experimental.pallas import tpu as pltpu

BN_EPS = 1e-5
LANE = 128   # pad feature / hidden / class dims to this (lane-dense)
SUB = 8      # pad graph count to a sublane multiple


# ----------------------------- Pallas kernel ------------------------------- #

def _fused_gcn_bn_kernel(a_ref, x_ref, p_ref,
                         w1, b1, g1, t1, w2, b2, g2, t2,
                         w3, b3, g3, t3, w4, b4, g4, t4,
                         fw1, fb1, fw2, fb2,
                         o_ref, *, num_classes):
    """Entire GCN_with_BN forward in one kernel.

    a_ref:  [N, N]   bf16 normalized adjacency (with self loops)
    x_ref:  [N, FP]  bf16 node features (feature dim zero-padded to LANE)
    p_ref:  [GP, N]  bf16 mean-pool matrix (graph rows zero-padded to SUB mult)
    w*/fw*: bf16 weights, zero-padded to [LANE, LANE]
    b*/g*/t*/fb*: f32 [1, LANE] bias / BN gamma / BN beta (zero-padded)
    o_ref:  [GP, LANE] f32 log-probabilities (real block is [:G, :C])
    """
    a = a_ref[...]                                   # [N, N] bf16
    n = a.shape[0]
    inv_n = jnp.float32(1.0 / n)
    h16 = x_ref[...]                                 # [N, LANE] bf16

    for (w_r, b_r, g_r, t_r) in ((w1, b1, g1, t1), (w2, b2, g2, t2),
                                 (w3, b3, g3, t3), (w4, b4, g4, t4)):
        # GCNConv:  A_norm @ (X @ W) + b     (bf16 MXU, f32 accumulate)
        xw = jnp.dot(h16, w_r[...], preferred_element_type=jnp.float32)
        h = jnp.dot(a, xw.astype(jnp.bfloat16),
                    preferred_element_type=jnp.float32) + b_r[...]
        h = jnp.maximum(h, 0.0)                      # ReLU (conv -> ReLU -> BN)
        # BatchNorm1d over the node axis: one-pass stats, biased variance.
        s1 = jnp.sum(h, axis=0, keepdims=True)
        s2 = jnp.sum(h * h, axis=0, keepdims=True)
        mean = s1 * inv_n
        var = jnp.maximum(s2 * inv_n - mean * mean, 0.0)
        scale = g_r[...] * jax.lax.rsqrt(var + BN_EPS)   # fold gamma into scale
        shift = t_r[...] - mean * scale
        h16 = (h * scale + shift).astype(jnp.bfloat16)   # scale*h + shift only

    # global_mean_pool -> fc1 -> ReLU -> fc2 -> log_softmax
    pooled = jnp.dot(p_ref[...], h16, preferred_element_type=jnp.float32)
    hid = jnp.dot(pooled.astype(jnp.bfloat16), fw1[...],
                  preferred_element_type=jnp.float32) + fb1[...]
    hid = jnp.maximum(hid, 0.0)
    logits = jnp.dot(hid.astype(jnp.bfloat16), fw2[...],
                     preferred_element_type=jnp.float32) + fb2[...]
    # Mask padded class lanes so they do not contribute to the softmax.
    col = jax.lax.broadcasted_iota(jnp.int32, logits.shape, 1)
    logits = jnp.where(col < num_classes, logits, jnp.float32(-1e30))
    m = jnp.max(logits, axis=-1, keepdims=True)
    z = logits - m
    lse = jnp.log(jnp.sum(jnp.exp(z), axis=-1, keepdims=True))
    o_ref[...] = z - lse


# ------------------------------ JAX glue ----------------------------------- #

def _pad2(x, rows, cols):
    r, c = x.shape
    return jnp.pad(x, ((0, rows - r), (0, cols - c)))


def build_norm_adj(edge_index, num_nodes):
    """Dense GCN normalization: D^{-1/2} (A + I) D^{-1/2}; A[dst, src]."""
    src, dst = edge_index[0], edge_index[1]
    adj = jnp.zeros((num_nodes, num_nodes), jnp.float32)
    adj = adj.at[dst, src].set(1.0)
    adj = adj + jnp.eye(num_nodes, dtype=jnp.float32)
    deg = jnp.sum(adj, axis=1)
    dinv = jax.lax.rsqrt(deg)
    return adj * dinv[:, None] * dinv[None, :]


def build_pool_matrix(batch, num_graphs, num_nodes):
    onehot = (batch[None, :] == jnp.arange(num_graphs)[:, None]).astype(jnp.float32)
    counts = jnp.maximum(jnp.sum(onehot, axis=1, keepdims=True), 1.0)
    return onehot / counts  # [G, N]


def init_params(key, num_features, num_hidden, num_classes):
    """Deterministic synthetic parameters (shapes match GCN_with_BN.__init__)."""
    ks = jax.random.split(key, 6)

    def lin(k, fan_in, fan_out):
        scale = 1.0 / jnp.sqrt(jnp.float32(fan_in))
        return (jax.random.uniform(k, (fan_in, fan_out), jnp.float32, -scale, scale),
                jnp.zeros((1, fan_out), jnp.float32))

    params = {}
    dims_in = [num_features, num_hidden, num_hidden, num_hidden]
    for i in range(4):
        w, b = lin(ks[i], dims_in[i], num_hidden)
        params[f"conv{i+1}"] = {"w": w, "b": b}
        params[f"bn{i+1}"] = {"gamma": jnp.ones((1, num_hidden), jnp.float32),
                              "beta": jnp.zeros((1, num_hidden), jnp.float32)}
    w1, b1 = lin(ks[4], num_hidden, num_hidden)
    w2, b2 = lin(ks[5], num_hidden, num_classes)
    params["fc1"] = {"w": w1, "b": b1}
    params["fc2"] = {"w": w2, "b": b2}
    return params


@functools.partial(jax.jit, static_argnames=("num_graphs",))
def gcn_with_bn_forward(params, x, edge_index, batch, num_graphs):
    n, _ = x.shape
    num_classes = params["fc2"]["w"].shape[1]
    gp = ((num_graphs + SUB - 1) // SUB) * SUB

    # Dense graph operators (bf16 for the MXU; values exact or ~1e-3 relative).
    a_norm = build_norm_adj(edge_index, n).astype(jnp.bfloat16)
    pool_p = _pad2(build_pool_matrix(batch, num_graphs, n), gp, n).astype(jnp.bfloat16)
    x_p = _pad2(x, n, LANE).astype(jnp.bfloat16)

    # Zero-pad all weights/bias/BN params to lane-dense [*, LANE] once.
    layer_args = []
    for i in range(1, 5):
        c, bn = params[f"conv{i}"], params[f"bn{i}"]
        layer_args += [
            _pad2(c["w"], LANE, LANE).astype(jnp.bfloat16),
            _pad2(c["b"], 1, LANE),
            _pad2(bn["gamma"], 1, LANE),
            _pad2(bn["beta"], 1, LANE),
        ]
    fw1 = _pad2(params["fc1"]["w"], LANE, LANE).astype(jnp.bfloat16)
    fb1 = _pad2(params["fc1"]["b"], 1, LANE)
    fw2 = _pad2(params["fc2"]["w"], LANE, LANE).astype(jnp.bfloat16)
    fb2 = _pad2(params["fc2"]["b"], 1, LANE)

    n_inputs = 3 + len(layer_args) + 4
    kernel = functools.partial(_fused_gcn_bn_kernel, num_classes=num_classes)
    out_p = pl.pallas_call(
        kernel,
        out_shape=jax.ShapeDtypeStruct((gp, LANE), jnp.float32),
        in_specs=[pl.BlockSpec(memory_space=pltpu.MemorySpace.VMEM)] * n_inputs,
        out_specs=pl.BlockSpec(memory_space=pltpu.MemorySpace.VMEM),
        compiler_params=pltpu.CompilerParams(vmem_limit_bytes=32 * 1024 * 1024),
    )(a_norm, x_p, pool_p, *layer_args, fw1, fb1, fw2, fb2)

    # TODO(synk): for large N, tile A_norm over node rows with a grid
    # ("parallel" axis for the second v7x TensorCore) instead of whole-array VMEM.
    return out_p[:num_graphs, :num_classes]


# ------------------------------- main --------------------------------------- #

if __name__ == "__main__":
    NUM_FEATURES = 4
    NUM_HIDDEN = 32
    NUM_CLASSES = 4
    NODES_PER_GRAPH = 16
    NUM_GRAPHS = 2
    N = NODES_PER_GRAPH * NUM_GRAPHS  # 32 nodes total

    key = jax.random.PRNGKey(0)
    k_param, k_x = jax.random.split(key)

    params = init_params(k_param, NUM_FEATURES, NUM_HIDDEN, NUM_CLASSES)

    # Node features [N, F]
    x = jax.random.normal(k_x, (N, NUM_FEATURES), jnp.float32)

    # Deterministic ring graph inside each of the 2 graphs (undirected edges).
    src_list, dst_list = [], []
    for g in range(NUM_GRAPHS):
        base = g * NODES_PER_GRAPH
        for i in range(NODES_PER_GRAPH):
            a = base + i
            b = base + (i + 1) % NODES_PER_GRAPH
            src_list += [a, b]
            dst_list += [b, a]
    edge_index = jnp.array([src_list, dst_list], dtype=jnp.int32)  # [2, E]

    # batch vector: node -> graph id
    batch = jnp.repeat(jnp.arange(NUM_GRAPHS, dtype=jnp.int32), NODES_PER_GRAPH)

    out = gcn_with_bn_forward(params, x, edge_index, batch, NUM_GRAPHS)
    out = jax.block_until_ready(out)

    assert out.shape == (NUM_GRAPHS, NUM_CLASSES)
    # log_softmax rows must sum (in prob space) to 1
    assert bool(jnp.all(jnp.abs(jnp.sum(jnp.exp(out), axis=-1) - 1.0) < 1e-3))
    print("KERNEL_OK")
</pallas_src>

<mosaic_0001>
module attributes {stable_mosaic.version = 11 : i64} {
  func.func @_fused_gcn_bn_kernel(%arg0: memref<32x32xbf16, #tpu.memory_space<vmem>>, %arg1: memref<32x128xbf16, #tpu.memory_space<vmem>>, %arg2: memref<8x32xbf16, #tpu.memory_space<vmem>>, %arg3: memref<128x128xbf16, #tpu.memory_space<vmem>>, %arg4: memref<1x128xf32, #tpu.memory_space<vmem>>, %arg5: memref<1x128xf32, #tpu.memory_space<vmem>>, %arg6: memref<1x128xf32, #tpu.memory_space<vmem>>, %arg7: memref<128x128xbf16, #tpu.memory_space<vmem>>, %arg8: memref<1x128xf32, #tpu.memory_space<vmem>>, %arg9: memref<1x128xf32, #tpu.memory_space<vmem>>, %arg10: memref<1x128xf32, #tpu.memory_space<vmem>>, %arg11: memref<128x128xbf16, #tpu.memory_space<vmem>>, %arg12: memref<1x128xf32, #tpu.memory_space<vmem>>, %arg13: memref<1x128xf32, #tpu.memory_space<vmem>>, %arg14: memref<1x128xf32, #tpu.memory_space<vmem>>, %arg15: memref<128x128xbf16, #tpu.memory_space<vmem>>, %arg16: memref<1x128xf32, #tpu.memory_space<vmem>>, %arg17: memref<1x128xf32, #tpu.memory_space<vmem>>, %arg18: memref<1x128xf32, #tpu.memory_space<vmem>>, %arg19: memref<128x128xbf16, #tpu.memory_space<vmem>>, %arg20: memref<1x128xf32, #tpu.memory_space<vmem>>, %arg21: memref<128x128xbf16, #tpu.memory_space<vmem>>, %arg22: memref<1x128xf32, #tpu.memory_space<vmem>>, %arg23: memref<8x128xf32, #tpu.memory_space<vmem>>) attributes {dimension_semantics = [], scalar_prefetch = 0 : i64, scratch_operands = 0 : i64, tpu.core_type = #tpu.core_type<tc>} {
    %c0 = arith.constant 0 : index
    %c0_0 = arith.constant 0 : index
    %0 = vector.load %arg0[%c0, %c0_0] : memref<32x32xbf16, #tpu.memory_space<vmem>>, vector<32x32xbf16>
    %c0_1 = arith.constant 0 : index
    %c0_2 = arith.constant 0 : index
    %1 = vector.load %arg1[%c0_1, %c0_2] : memref<32x128xbf16, #tpu.memory_space<vmem>>, vector<32x128xbf16>
    %c0_3 = arith.constant 0 : index
    %c0_4 = arith.constant 0 : index
    %2 = vector.load %arg3[%c0_3, %c0_4] : memref<128x128xbf16, #tpu.memory_space<vmem>>, vector<128x128xbf16>
    %cst = arith.constant dense<0.000000e+00> : vector<32x128xf32>
    %3 = tpu.matmul %1, %2, %cst {dimension_numbers = #tpu.dot_dimension_numbers<[1], [0], [0], [1], [0, 0, 1, 1], [], []>} : vector<32x128xbf16>, vector<128x128xbf16>, vector<32x128xf32> -> vector<32x128xf32>
    %4 = arith.truncf %3 : vector<32x128xf32> to vector<32x128xbf16>
    %cst_5 = arith.constant dense<0.000000e+00> : vector<32x128xf32>
    %5 = tpu.matmul %0, %4, %cst_5 {dimension_numbers = #tpu.dot_dimension_numbers<[1], [0], [0], [1], [0, 0, 1, 1], [], []>} : vector<32x32xbf16>, vector<32x128xbf16>, vector<32x128xf32> -> vector<32x128xf32>
    %c0_6 = arith.constant 0 : index
    %c0_7 = arith.constant 0 : index
    %6 = vector.load %arg4[%c0_6, %c0_7] : memref<1x128xf32, #tpu.memory_space<vmem>>, vector<1x128xf32>
    %7 = vector.broadcast %6 : vector<1x128xf32> to vector<32x128xf32>
    %8 = arith.addf %5, %7 : vector<32x128xf32>
    %cst_8 = arith.constant 0.000000e+00 : f32
    %9 = vector.broadcast %cst_8 : f32 to vector<32x128xf32>
    %10 = arith.maximumf %8, %9 : vector<32x128xf32>
    %cst_9 = arith.constant dense<0.000000e+00> : vector<128xf32>
    %11 = vector.multi_reduction <add>, %10, %cst_9 [0] : vector<32x128xf32> to vector<128xf32>
    %12 = vector.shape_cast %11 : vector<128xf32> to vector<1x128xf32>
    %13 = arith.mulf %10, %10 : vector<32x128xf32>
    %cst_10 = arith.constant dense<0.000000e+00> : vector<128xf32>
    %14 = vector.multi_reduction <add>, %13, %cst_10 [0] : vector<32x128xf32> to vector<128xf32>
    %15 = vector.shape_cast %14 : vector<128xf32> to vector<1x128xf32>
    %cst_11 = arith.constant 3.125000e-02 : f32
    %16 = vector.broadcast %cst_11 : f32 to vector<1x128xf32>
    %17 = arith.mulf %12, %16 : vector<1x128xf32>
    %cst_12 = arith.constant 3.125000e-02 : f32
    %18 = vector.broadcast %cst_12 : f32 to vector<1x128xf32>
    %19 = arith.mulf %15, %18 : vector<1x128xf32>
    %20 = arith.mulf %17, %17 : vector<1x128xf32>
    %21 = arith.subf %19, %20 : vector<1x128xf32>
    %cst_13 = arith.constant 0.000000e+00 : f32
    %22 = vector.broadcast %cst_13 : f32 to vector<1x128xf32>
    %23 = arith.maximumf %21, %22 : vector<1x128xf32>
    %c0_14 = arith.constant 0 : index
    %c0_15 = arith.constant 0 : index
    %24 = vector.load %arg5[%c0_14, %c0_15] : memref<1x128xf32, #tpu.memory_space<vmem>>, vector<1x128xf32>
    %cst_16 = arith.constant 9.99999974E-6 : f32
    %25 = vector.broadcast %cst_16 : f32 to vector<1x128xf32>
    %26 = arith.addf %23, %25 : vector<1x128xf32>
    %27 = math.rsqrt %26 : vector<1x128xf32>
    %28 = arith.mulf %24, %27 : vector<1x128xf32>
    %c0_17 = arith.constant 0 : index
    %c0_18 = arith.constant 0 : index
    %29 = vector.load %arg6[%c0_17, %c0_18] : memref<1x128xf32, #tpu.memory_space<vmem>>, vector<1x128xf32>
    %30 = arith.mulf %17, %28 : vector<1x128xf32>
    %31 = arith.subf %29, %30 : vector<1x128xf32>
    %32 = vector.broadcast %28 : vector<1x128xf32> to vector<32x128xf32>
    %33 = arith.mulf %10, %32 : vector<32x128xf32>
    %34 = vector.broadcast %31 : vector<1x128xf32> to vector<32x128xf32>
    %35 = arith.addf %33, %34 : vector<32x128xf32>
    %36 = arith.truncf %35 : vector<32x128xf32> to vector<32x128xbf16>
    %c0_19 = arith.constant 0 : index
    %c0_20 = arith.constant 0 : index
    %37 = vector.load %arg7[%c0_19, %c0_20] : memref<128x128xbf16, #tpu.memory_space<vmem>>, vector<128x128xbf16>
    %cst_21 = arith.constant dense<0.000000e+00> : vector<32x128xf32>
    %38 = tpu.matmul %36, %37, %cst_21 {dimension_numbers = #tpu.dot_dimension_numbers<[1], [0], [0], [1], [0, 0, 1, 1], [], []>} : vector<32x128xbf16>, vector<128x128xbf16>, vector<32x128xf32> -> vector<32x128xf32>
    %39 = arith.truncf %38 : vector<32x128xf32> to vector<32x128xbf16>
    %cst_22 = arith.constant dense<0.000000e+00> : vector<32x128xf32>
    %40 = tpu.matmul %0, %39, %cst_22 {dimension_numbers = #tpu.dot_dimension_numbers<[1], [0], [0], [1], [0, 0, 1, 1], [], []>} : vector<32x32xbf16>, vector<32x128xbf16>, vector<32x128xf32> -> vector<32x128xf32>
    %c0_23 = arith.constant 0 : index
    %c0_24 = arith.constant 0 : index
    %41 = vector.load %arg8[%c0_23, %c0_24] : memref<1x128xf32, #tpu.memory_space<vmem>>, vector<1x128xf32>
    %42 = vector.broadcast %41 : vector<1x128xf32> to vector<32x128xf32>
    %43 = arith.addf %40, %42 : vector<32x128xf32>
    %cst_25 = arith.constant 0.000000e+00 : f32
    %44 = vector.broadcast %cst_25 : f32 to vector<32x128xf32>
    %45 = arith.maximumf %43, %44 : vector<32x128xf32>
    %cst_26 = arith.constant dense<0.000000e+00> : vector<128xf32>
    %46 = vector.multi_reduction <add>, %45, %cst_26 [0] : vector<32x128xf32> to vector<128xf32>
    %47 = vector.shape_cast %46 : vector<128xf32> to vector<1x128xf32>
    %48 = arith.mulf %45, %45 : vector<32x128xf32>
    %cst_27 = arith.constant dense<0.000000e+00> : vector<128xf32>
    %49 = vector.multi_reduction <add>, %48, %cst_27 [0] : vector<32x128xf32> to vector<128xf32>
    %50 = vector.shape_cast %49 : vector<128xf32> to vector<1x128xf32>
    %cst_28 = arith.constant 3.125000e-02 : f32
    %51 = vector.broadcast %cst_28 : f32 to vector<1x128xf32>
    %52 = arith.mulf %47, %51 : vector<1x128xf32>
    %cst_29 = arith.constant 3.125000e-02 : f32
    %53 = vector.broadcast %cst_29 : f32 to vector<1x128xf32>
    %54 = arith.mulf %50, %53 : vector<1x128xf32>
    %55 = arith.mulf %52, %52 : vector<1x128xf32>
    %56 = arith.subf %54, %55 : vector<1x128xf32>
    %cst_30 = arith.constant 0.000000e+00 : f32
    %57 = vector.broadcast %cst_30 : f32 to vector<1x128xf32>
    %58 = arith.maximumf %56, %57 : vector<1x128xf32>
    %c0_31 = arith.constant 0 : index
    %c0_32 = arith.constant 0 : index
    %59 = vector.load %arg9[%c0_31, %c0_32] : memref<1x128xf32, #tpu.memory_space<vmem>>, vector<1x128xf32>
    %cst_33 = arith.constant 9.99999974E-6 : f32
    %60 = vector.broadcast %cst_33 : f32 to vector<1x128xf32>
    %61 = arith.addf %58, %60 : vector<1x128xf32>
    %62 = math.rsqrt %61 : vector<1x128xf32>
    %63 = arith.mulf %59, %62 : vector<1x128xf32>
    %c0_34 = arith.constant 0 : index
    %c0_35 = arith.constant 0 : index
    %64 = vector.load %arg10[%c0_34, %c0_35] : memref<1x128xf32, #tpu.memory_space<vmem>>, vector<1x128xf32>
    %65 = arith.mulf %52, %63 : vector<1x128xf32>
    %66 = arith.subf %64, %65 : vector<1x128xf32>
    %67 = vector.broadcast %63 : vector<1x128xf32> to vector<32x128xf32>
    %68 = arith.mulf %45, %67 : vector<32x128xf32>
    %69 = vector.broadcast %66 : vector<1x128xf32> to vector<32x128xf32>
    %70 = arith.addf %68, %69 : vector<32x128xf32>
    %71 = arith.truncf %70 : vector<32x128xf32> to vector<32x128xbf16>
    %c0_36 = arith.constant 0 : index
    %c0_37 = arith.constant 0 : index
    %72 = vector.load %arg11[%c0_36, %c0_37] : memref<128x128xbf16, #tpu.memory_space<vmem>>, vector<128x128xbf16>
    %cst_38 = arith.constant dense<0.000000e+00> : vector<32x128xf32>
    %73 = tpu.matmul %71, %72, %cst_38 {dimension_numbers = #tpu.dot_dimension_numbers<[1], [0], [0], [1], [0, 0, 1, 1], [], []>} : vector<32x128xbf16>, vector<128x128xbf16>, vector<32x128xf32> -> vector<32x128xf32>
    %74 = arith.truncf %73 : vector<32x128xf32> to vector<32x128xbf16>
    %cst_39 = arith.constant dense<0.000000e+00> : vector<32x128xf32>
    %75 = tpu.matmul %0, %74, %cst_39 {dimension_numbers = #tpu.dot_dimension_numbers<[1], [0], [0], [1], [0, 0, 1, 1], [], []>} : vector<32x32xbf16>, vector<32x128xbf16>, vector<32x128xf32> -> vector<32x128xf32>
    %c0_40 = arith.constant 0 : index
    %c0_41 = arith.constant 0 : index
    %76 = vector.load %arg12[%c0_40, %c0_41] : memref<1x128xf32, #tpu.memory_space<vmem>>, vector<1x128xf32>
    %77 = vector.broadcast %76 : vector<1x128xf32> to vector<32x128xf32>
    %78 = arith.addf %75, %77 : vector<32x128xf32>
    %cst_42 = arith.constant 0.000000e+00 : f32
    %79 = vector.broadcast %cst_42 : f32 to vector<32x128xf32>
    %80 = arith.maximumf %78, %79 : vector<32x128xf32>
    %cst_43 = arith.constant dense<0.000000e+00> : vector<128xf32>
    %81 = vector.multi_reduction <add>, %80, %cst_43 [0] : vector<32x128xf32> to vector<128xf32>
    %82 = vector.shape_cast %81 : vector<128xf32> to vector<1x128xf32>
    %83 = arith.mulf %80, %80 : vector<32x128xf32>
    %cst_44 = arith.constant dense<0.000000e+00> : vector<128xf32>
    %84 = vector.multi_reduction <add>, %83, %cst_44 [0] : vector<32x128xf32> to vector<128xf32>
    %85 = vector.shape_cast %84 : vector<128xf32> to vector<1x128xf32>
    %cst_45 = arith.constant 3.125000e-02 : f32
    %86 = vector.broadcast %cst_45 : f32 to vector<1x128xf32>
    %87 = arith.mulf %82, %86 : vector<1x128xf32>
    %cst_46 = arith.constant 3.125000e-02 : f32
    %88 = vector.broadcast %cst_46 : f32 to vector<1x128xf32>
    %89 = arith.mulf %85, %88 : vector<1x128xf32>
    %90 = arith.mulf %87, %87 : vector<1x128xf32>
    %91 = arith.subf %89, %90 : vector<1x128xf32>
    %cst_47 = arith.constant 0.000000e+00 : f32
    %92 = vector.broadcast %cst_47 : f32 to vector<1x128xf32>
    %93 = arith.maximumf %91, %92 : vector<1x128xf32>
    %c0_48 = arith.constant 0 : index
    %c0_49 = arith.constant 0 : index
    %94 = vector.load %arg13[%c0_48, %c0_49] : memref<1x128xf32, #tpu.memory_space<vmem>>, vector<1x128xf32>
    %cst_50 = arith.constant 9.99999974E-6 : f32
    %95 = vector.broadcast %cst_50 : f32 to vector<1x128xf32>
    %96 = arith.addf %93, %95 : vector<1x128xf32>
    %97 = math.rsqrt %96 : vector<1x128xf32>
    %98 = arith.mulf %94, %97 : vector<1x128xf32>
    %c0_51 = arith.constant 0 : index
    %c0_52 = arith.constant 0 : index
    %99 = vector.load %arg14[%c0_51, %c0_52] : memref<1x128xf32, #tpu.memory_space<vmem>>, vector<1x128xf32>
    %100 = arith.mulf %87, %98 : vector<1x128xf32>
    %101 = arith.subf %99, %100 : vector<1x128xf32>
    %102 = vector.broadcast %98 : vector<1x128xf32> to vector<32x128xf32>
    %103 = arith.mulf %80, %102 : vector<32x128xf32>
    %104 = vector.broadcast %101 : vector<1x128xf32> to vector<32x128xf32>
    %105 = arith.addf %103, %104 : vector<32x128xf32>
    %106 = arith.truncf %105 : vector<32x128xf32> to vector<32x128xbf16>
    %c0_53 = arith.constant 0 : index
    %c0_54 = arith.constant 0 : index
    %107 = vector.load %arg15[%c0_53, %c0_54] : memref<128x128xbf16, #tpu.memory_space<vmem>>, vector<128x128xbf16>
    %cst_55 = arith.constant dense<0.000000e+00> : vector<32x128xf32>
    %108 = tpu.matmul %106, %107, %cst_55 {dimension_numbers = #tpu.dot_dimension_numbers<[1], [0], [0], [1], [0, 0, 1, 1], [], []>} : vector<32x128xbf16>, vector<128x128xbf16>, vector<32x128xf32> -> vector<32x128xf32>
    %109 = arith.truncf %108 : vector<32x128xf32> to vector<32x128xbf16>
    %cst_56 = arith.constant dense<0.000000e+00> : vector<32x128xf32>
    %110 = tpu.matmul %0, %109, %cst_56 {dimension_numbers = #tpu.dot_dimension_numbers<[1], [0], [0], [1], [0, 0, 1, 1], [], []>} : vector<32x32xbf16>, vector<32x128xbf16>, vector<32x128xf32> -> vector<32x128xf32>
    %c0_57 = arith.constant 0 : index
    %c0_58 = arith.constant 0 : index
    %111 = vector.load %arg16[%c0_57, %c0_58] : memref<1x128xf32, #tpu.memory_space<vmem>>, vector<1x128xf32>
    %112 = vector.broadcast %111 : vector<1x128xf32> to vector<32x128xf32>
    %113 = arith.addf %110, %112 : vector<32x128xf32>
    %cst_59 = arith.constant 0.000000e+00 : f32
    %114 = vector.broadcast %cst_59 : f32 to vector<32x128xf32>
    %115 = arith.maximumf %113, %114 : vector<32x128xf32>
    %cst_60 = arith.constant dense<0.000000e+00> : vector<128xf32>
    %116 = vector.multi_reduction <add>, %115, %cst_60 [0] : vector<32x128xf32> to vector<128xf32>
    %117 = vector.shape_cast %116 : vector<128xf32> to vector<1x128xf32>
    %118 = arith.mulf %115, %115 : vector<32x128xf32>
    %cst_61 = arith.constant dense<0.000000e+00> : vector<128xf32>
    %119 = vector.multi_reduction <add>, %118, %cst_61 [0] : vector<32x128xf32> to vector<128xf32>
    %120 = vector.shape_cast %119 : vector<128xf32> to vector<1x128xf32>
    %cst_62 = arith.constant 3.125000e-02 : f32
    %121 = vector.broadcast %cst_62 : f32 to vector<1x128xf32>
    %122 = arith.mulf %117, %121 : vector<1x128xf32>
    %cst_63 = arith.constant 3.125000e-02 : f32
    %123 = vector.broadcast %cst_63 : f32 to vector<1x128xf32>
    %124 = arith.mulf %120, %123 : vector<1x128xf32>
    %125 = arith.mulf %122, %122 : vector<1x128xf32>
    %126 = arith.subf %124, %125 : vector<1x128xf32>
    %cst_64 = arith.constant 0.000000e+00 : f32
    %127 = vector.broadcast %cst_64 : f32 to vector<1x128xf32>
    %128 = arith.maximumf %126, %127 : vector<1x128xf32>
    %c0_65 = arith.constant 0 : index
    %c0_66 = arith.constant 0 : index
    %129 = vector.load %arg17[%c0_65, %c0_66] : memref<1x128xf32, #tpu.memory_space<vmem>>, vector<1x128xf32>
    %cst_67 = arith.constant 9.99999974E-6 : f32
    %130 = vector.broadcast %cst_67 : f32 to vector<1x128xf32>
    %131 = arith.addf %128, %130 : vector<1x128xf32>
    %132 = math.rsqrt %131 : vector<1x128xf32>
    %133 = arith.mulf %129, %132 : vector<1x128xf32>
    %c0_68 = arith.constant 0 : index
    %c0_69 = arith.constant 0 : index
    %134 = vector.load %arg18[%c0_68, %c0_69] : memref<1x128xf32, #tpu.memory_space<vmem>>, vector<1x128xf32>
    %135 = arith.mulf %122, %133 : vector<1x128xf32>
    %136 = arith.subf %134, %135 : vector<1x128xf32>
    %137 = vector.broadcast %133 : vector<1x128xf32> to vector<32x128xf32>
    %138 = arith.mulf %115, %137 : vector<32x128xf32>
    %139 = vector.broadcast %136 : vector<1x128xf32> to vector<32x128xf32>
    %140 = arith.addf %138, %139 : vector<32x128xf32>
    %141 = arith.truncf %140 : vector<32x128xf32> to vector<32x128xbf16>
    %c0_70 = arith.constant 0 : index
    %c0_71 = arith.constant 0 : index
    %142 = vector.load %arg2[%c0_70, %c0_71] : memref<8x32xbf16, #tpu.memory_space<vmem>>, vector<8x32xbf16>
    %cst_72 = arith.constant dense<0.000000e+00> : vector<8x128xf32>
    %143 = tpu.matmul %142, %141, %cst_72 {dimension_numbers = #tpu.dot_dimension_numbers<[1], [0], [0], [1], [0, 0, 1, 1], [], []>} : vector<8x32xbf16>, vector<32x128xbf16>, vector<8x128xf32> -> vector<8x128xf32>
    %144 = arith.truncf %143 : vector<8x128xf32> to vector<8x128xbf16>
    %c0_73 = arith.constant 0 : index
    %c0_74 = arith.constant 0 : index
    %145 = vector.load %arg19[%c0_73, %c0_74] : memref<128x128xbf16, #tpu.memory_space<vmem>>, vector<128x128xbf16>
    %cst_75 = arith.constant dense<0.000000e+00> : vector<8x128xf32>
    %146 = tpu.matmul %144, %145, %cst_75 {dimension_numbers = #tpu.dot_dimension_numbers<[1], [0], [0], [1], [0, 0, 1, 1], [], []>} : vector<8x128xbf16>, vector<128x128xbf16>, vector<8x128xf32> -> vector<8x128xf32>
    %c0_76 = arith.constant 0 : index
    %c0_77 = arith.constant 0 : index
    %147 = vector.load %arg20[%c0_76, %c0_77] : memref<1x128xf32, #tpu.memory_space<vmem>>, vector<1x128xf32>
    %148 = vector.broadcast %147 : vector<1x128xf32> to vector<8x128xf32>
    %149 = arith.addf %146, %148 : vector<8x128xf32>
    %cst_78 = arith.constant 0.000000e+00 : f32
    %150 = vector.broadcast %cst_78 : f32 to vector<8x128xf32>
    %151 = arith.maximumf %149, %150 : vector<8x128xf32>
    %152 = arith.truncf %151 : vector<8x128xf32> to vector<8x128xbf16>
    %c0_79 = arith.constant 0 : index
    %c0_80 = arith.constant 0 : index
    %153 = vector.load %arg21[%c0_79, %c0_80] : memref<128x128xbf16, #tpu.memory_space<vmem>>, vector<128x128xbf16>
    %cst_81 = arith.constant dense<0.000000e+00> : vector<8x128xf32>
    %154 = tpu.matmul %152, %153, %cst_81 {dimension_numbers = #tpu.dot_dimension_numbers<[1], [0], [0], [1], [0, 0, 1, 1], [], []>} : vector<8x128xbf16>, vector<128x128xbf16>, vector<8x128xf32> -> vector<8x128xf32>
    %c0_82 = arith.constant 0 : index
    %c0_83 = arith.constant 0 : index
    %155 = vector.load %arg22[%c0_82, %c0_83] : memref<1x128xf32, #tpu.memory_space<vmem>>, vector<1x128xf32>
    %156 = vector.broadcast %155 : vector<1x128xf32> to vector<8x128xf32>
    %157 = arith.addf %154, %156 : vector<8x128xf32>
    %158 = tpu.iota {dimensions = array<i32: 1>} : vector<8x128xi32>
    %c4_i32 = arith.constant 4 : i32
    %159 = vector.broadcast %c4_i32 : i32 to vector<8x128xi32>
    %160 = arith.cmpi slt, %158, %159 : vector<8x128xi32>
    %cst_84 = arith.constant -1.000000e+30 : f32
    %161 = vector.broadcast %cst_84 : f32 to vector<8x128xf32>
    %162 = arith.select %160, %157, %161 : vector<8x128xi1>, vector<8x128xf32>
    %cst_85 = arith.constant dense<0xFF800000> : vector<8xf32>
    %163 = vector.multi_reduction <maximumf>, %162, %cst_85 [1] : vector<8x128xf32> to vector<8xf32>
    %164 = vector.shape_cast %163 : vector<8xf32> to vector<8x1xf32>
    %165 = vector.broadcast %164 : vector<8x1xf32> to vector<8x128xf32>
    %166 = arith.subf %162, %165 : vector<8x128xf32>
    %167 = math.exp %166 : vector<8x128xf32>
    %cst_86 = arith.constant dense<0.000000e+00> : vector<8xf32>
    %168 = vector.multi_reduction <add>, %167, %cst_86 [1] : vector<8x128xf32> to vector<8xf32>
    %169 = vector.shape_cast %168 : vector<8xf32> to vector<8x1xf32>
    %170 = math.log %169 : vector<8x1xf32>
    %171 = vector.broadcast %170 : vector<8x1xf32> to vector<8x128xf32>
    %172 = arith.subf %166, %171 : vector<8x128xf32>
    %c0_87 = arith.constant 0 : index
    %c0_88 = arith.constant 0 : index
    %173 = vector.load %arg23[%c0_87, %c0_88] : memref<8x128xf32, #tpu.memory_space<vmem>>, vector<8x128xf32>
    tpu.vector_store %arg23[%c0_87, %c0_88], %172 {strides = array<i32>} : memref<8x128xf32, #tpu.memory_space<vmem>>, vector<8x128xf32>,
    return
  }
}

</mosaic_0001>

<llo_original>
// kernel: gcn_with_bn_forward.1
$region0: #{gcn_with_bn_forward.1}
  #allocation0 [shape = 'u32[]', space=smem, size = 0x4, offset = 0x4, fixed_abs, tag = 'smem constant byte address 0x4 - core index']
  #allocation1 [shape = 'u32[144,128]{1,0:T(1,128)}', space=vmem, size = 0x12000, scoped, tag = 'internal scratch']
  %s0 = inlined_call_operand.vmem [shape: bf16[32,32], index: 0, kind: input, shape index: {}]
  %s1 = inlined_call_operand.vmem [shape: bf16[32,128], index: 1, kind: input, shape index: {}]
  %s2 = inlined_call_operand.vmem [shape: bf16[8,32], index: 2, kind: input, shape index: {}]
  %s3 = inlined_call_operand.vmem [shape: bf16[128,128], index: 3, kind: input, shape index: {}]
  %s4 = inlined_call_operand.vmem [shape: f32[1,128], index: 4, kind: input, shape index: {}]
  %s5 = inlined_call_operand.vmem [shape: f32[1,128], index: 5, kind: input, shape index: {}]
  %s6 = inlined_call_operand.vmem [shape: f32[1,128], index: 6, kind: input, shape index: {}]
  %s7 = inlined_call_operand.vmem [shape: bf16[128,128], index: 7, kind: input, shape index: {}]
  %s8 = inlined_call_operand.vmem [shape: f32[1,128], index: 8, kind: input, shape index: {}]
  %s9 = inlined_call_operand.vmem [shape: f32[1,128], index: 9, kind: input, shape index: {}]
  %s10 = inlined_call_operand.vmem [shape: f32[1,128], index: 10, kind: input, shape index: {}]
  %s11 = inlined_call_operand.vmem [shape: bf16[128,128], index: 11, kind: input, shape index: {}]
  %s12 = inlined_call_operand.vmem [shape: f32[1,128], index: 12, kind: input, shape index: {}]
  %s13 = inlined_call_operand.vmem [shape: f32[1,128], index: 13, kind: input, shape index: {}]
  %s14 = inlined_call_operand.vmem [shape: f32[1,128], index: 14, kind: input, shape index: {}]
  %s15 = inlined_call_operand.vmem [shape: bf16[128,128], index: 15, kind: input, shape index: {}]
  %s16 = inlined_call_operand.vmem [shape: f32[1,128], index: 16, kind: input, shape index: {}]
  %s17 = inlined_call_operand.vmem [shape: f32[1,128], index: 17, kind: input, shape index: {}]
  %s18 = inlined_call_operand.vmem [shape: f32[1,128], index: 18, kind: input, shape index: {}]
  %s19 = inlined_call_operand.vmem [shape: bf16[128,128], index: 19, kind: input, shape index: {}]
  %s20 = inlined_call_operand.vmem [shape: f32[1,128], index: 20, kind: input, shape index: {}]
  %s21 = inlined_call_operand.vmem [shape: bf16[128,128], index: 21, kind: input, shape index: {}]
  %s22 = inlined_call_operand.vmem [shape: f32[1,128], index: 22, kind: input, shape index: {}]
  %s23 = inlined_call_operand.vmem [shape: f32[8,128], index: 23, kind: output, shape index: {}]
  %s24 = sld [smem:[#allocation0]]
  $region102: #{gcn_with_bn_forward.1} parent=0
    _
  %s26 = ssub.s32 1, %s24
  %s27 = scalar_select 0, %s26, %s24
  // Predicated region
  $region2: #{gcn_with_bn_forward.1} parent=0 // pred_check
    _
  $region3: #{gcn_with_bn_forward.1} parent=0 // pred_check_branch
    %29 = sbr.rel (0) target = $region5
  $region4: #{gcn_with_bn_forward.1} parent=0 // pred_region
    _
  $region5: #{gcn_with_bn_forward.1} parent=0 // pred_fallthru
    _
  // Predicated region
  $region6: #{gcn_with_bn_forward.1} parent=0 // pred_check
    _
  $region7: #{gcn_with_bn_forward.1} parent=0 // pred_check_branch
    %31 = sbr.rel (0) target = $region9
  $region8: #{gcn_with_bn_forward.1} parent=0 // pred_region
    _
  $region9: #{gcn_with_bn_forward.1} parent=0 // pred_fallthru
    _
  // Predicated region
  $region10: #{gcn_with_bn_forward.1} parent=0 // pred_check
    _
  $region11: #{gcn_with_bn_forward.1} parent=0 // pred_check_branch
    %33 = sbr.rel (0) target = $region13
  $region12: #{gcn_with_bn_forward.1} parent=0 // pred_region
    _
  $region13: #{gcn_with_bn_forward.1} parent=0 // pred_fallthru
    _
  // Predicated region
  $region14: #{gcn_with_bn_forward.1} parent=0 // pred_check
    _
  $region15: #{gcn_with_bn_forward.1} parent=0 // pred_check_branch
    %35 = sbr.rel (0) target = $region17
  $region16: #{gcn_with_bn_forward.1} parent=0 // pred_region
    _
  $region17: #{gcn_with_bn_forward.1} parent=0 // pred_fallthru
    _
  // Predicated region
  $region18: #{gcn_with_bn_forward.1} parent=0 // pred_check
    _
  $region19: #{gcn_with_bn_forward.1} parent=0 // pred_check_branch
    %37 = sbr.rel (0) target = $region21
  $region20: #{gcn_with_bn_forward.1} parent=0 // pred_region
    _
  $region21: #{gcn_with_bn_forward.1} parent=0 // pred_fallthru
    _
  // Predicated region
  $region22: #{gcn_with_bn_forward.1} parent=0 // pred_check
    _
  $region23: #{gcn_with_bn_forward.1} parent=0 // pred_check_branch
    %39 = sbr.rel (0) target = $region25
  $region24: #{gcn_with_bn_forward.1} parent=0 // pred_region
    _
  $region25: #{gcn_with_bn_forward.1} parent=0 // pred_fallthru
    _
  // Predicated region
  $region26: #{gcn_with_bn_forward.1} parent=0 // pred_check
    _
  $region27: #{gcn_with_bn_forward.1} parent=0 // pred_check_branch
    %41 = sbr.rel (0) target = $region29
  $region28: #{gcn_with_bn_forward.1} parent=0 // pred_region
    _
  $region29: #{gcn_with_bn_forward.1} parent=0 // pred_fallthru
    _
  // Predicated region
  $region30: #{gcn_with_bn_forward.1} parent=0 // pred_check
    _
  $region31: #{gcn_with_bn_forward.1} parent=0 // pred_check_branch
    %43 = sbr.rel (0) target = $region33
  $region32: #{gcn_with_bn_forward.1} parent=0 // pred_region
    _
  $region33: #{gcn_with_bn_forward.1} parent=0 // pred_fallthru
    _
  // Predicated region
  $region34: #{gcn_with_bn_forward.1} parent=0 // pred_check
    _
  $region35: #{gcn_with_bn_forward.1} parent=0 // pred_check_branch
    %45 = sbr.rel (0) target = $region37
  $region36: #{gcn_with_bn_forward.1} parent=0 // pred_region
    _
  $region37: #{gcn_with_bn_forward.1} parent=0 // pred_fallthru
    _
  // Predicated region
  $region38: #{gcn_with_bn_forward.1} parent=0 // pred_check
    _
  $region39: #{gcn_with_bn_forward.1} parent=0 // pred_check_branch
    %47 = sbr.rel (0) target = $region41
  $region40: #{gcn_with_bn_forward.1} parent=0 // pred_region
    _
  $region41: #{gcn_with_bn_forward.1} parent=0 // pred_fallthru
    _
  // Predicated region
  $region42: #{gcn_with_bn_forward.1} parent=0 // pred_check
    _
  $region43: #{gcn_with_bn_forward.1} parent=0 // pred_check_branch
    %49 = sbr.rel (0) target = $region45
  $region44: #{gcn_with_bn_forward.1} parent=0 // pred_region
    _
  $region45: #{gcn_with_bn_forward.1} parent=0 // pred_fallthru
    _
  // Predicated region
  $region46: #{gcn_with_bn_forward.1} parent=0 // pred_check
    _
  $region47: #{gcn_with_bn_forward.1} parent=0 // pred_check_branch
    %51 = sbr.rel (0) target = $region49
  $region48: #{gcn_with_bn_forward.1} parent=0 // pred_region
    _
  $region49: #{gcn_with_bn_forward.1} parent=0 // pred_fallthru
    _
  // Predicated region
  $region50: #{gcn_with_bn_forward.1} parent=0 // pred_check
    _
  $region51: #{gcn_with_bn_forward.1} parent=0 // pred_check_branch
    %53 = sbr.rel (0) target = $region53
  $region52: #{gcn_with_bn_forward.1} parent=0 // pred_region
    _
  $region53: #{gcn_with_bn_forward.1} parent=0 // pred_fallthru
    _
  // Predicated region
  $region54: #{gcn_with_bn_forward.1} parent=0 // pred_check
    _
  $region55: #{gcn_with_bn_forward.1} parent=0 // pred_check_branch
    %55 = sbr.rel (0) target = $region57
  $region56: #{gcn_with_bn_forward.1} parent=0 // pred_region
    _
  $region57: #{gcn_with_bn_forward.1} parent=0 // pred_fallthru
    _
  // Predicated region
  $region58: #{gcn_with_bn_forward.1} parent=0 // pred_check
    _
  $region59: #{gcn_with_bn_forward.1} parent=0 // pred_check_branch
    %57 = sbr.rel (0) target = $region61
  $region60: #{gcn_with_bn_forward.1} parent=0 // pred_region
    _
  $region61: #{gcn_with_bn_forward.1} parent=0 // pred_fallthru
    _
  // Predicated region
  $region62: #{gcn_with_bn_forward.1} parent=0 // pred_check
    _
  $region63: #{gcn_with_bn_forward.1} parent=0 // pred_check_branch
    %59 = sbr.rel (0) target = $region65
  $region64: #{gcn_with_bn_forward.1} parent=0 // pred_region
    _
  $region65: #{gcn_with_bn_forward.1} parent=0 // pred_fallthru
    _
  // Predicated region
  $region66: #{gcn_with_bn_forward.1} parent=0 // pred_check
    _
  $region67: #{gcn_with_bn_forward.1} parent=0 // pred_check_branch
    %61 = sbr.rel (0) target = $region69
  $region68: #{gcn_with_bn_forward.1} parent=0 // pred_region
    _
  $region69: #{gcn_with_bn_forward.1} parent=0 // pred_fallthru
    _
  // Predicated region
  $region70: #{gcn_with_bn_forward.1} parent=0 // pred_check
    _
  $region71: #{gcn_with_bn_forward.1} parent=0 // pred_check_branch
    %63 = sbr.rel (0) target = $region73
  $region72: #{gcn_with_bn_forward.1} parent=0 // pred_region
    _
  $region73: #{gcn_with_bn_forward.1} parent=0 // pred_fallthru
    _
  // Predicated region
  $region74: #{gcn_with_bn_forward.1} parent=0 // pred_check
    _
  $region75: #{gcn_with_bn_forward.1} parent=0 // pred_check_branch
    %65 = sbr.rel (0) target = $region77
  $region76: #{gcn_with_bn_forward.1} parent=0 // pred_region
    _
  $region77: #{gcn_with_bn_forward.1} parent=0 // pred_fallthru
    _
  // Predicated region
  $region78: #{gcn_with_bn_forward.1} parent=0 // pred_check
    _
  $region79: #{gcn_with_bn_forward.1} parent=0 // pred_check_branch
    %67 = sbr.rel (0) target = $region81
  $region80: #{gcn_with_bn_forward.1} parent=0 // pred_region
    _
  $region81: #{gcn_with_bn_forward.1} parent=0 // pred_fallthru
    _
  // Predicated region
  $region82: #{gcn_with_bn_forward.1} parent=0 // pred_check
    _
  $region83: #{gcn_with_bn_forward.1} parent=0 // pred_check_branch
    %69 = sbr.rel (0) target = $region85
  $region84: #{gcn_with_bn_forward.1} parent=0 // pred_region
    _
  $region85: #{gcn_with_bn_forward.1} parent=0 // pred_fallthru
    _
  // Predicated region
  $region86: #{gcn_with_bn_forward.1} parent=0 // pred_check
    _
  $region87: #{gcn_with_bn_forward.1} parent=0 // pred_check_branch
    %71 = sbr.rel (0) target = $region89
  $region88: #{gcn_with_bn_forward.1} parent=0 // pred_region
    _
  $region89: #{gcn_with_bn_forward.1} parent=0 // pred_fallthru
    _
  // Predicated region
  $region90: #{gcn_with_bn_forward.1} parent=0 // pred_check
    _
  $region91: #{gcn_with_bn_forward.1} parent=0 // pred_check_branch
    %73 = sbr.rel (0) target = $region93
  $region92: #{gcn_with_bn_forward.1} parent=0 // pred_region
    _
  $region93: #{gcn_with_bn_forward.1} parent=0 // pred_fallthru
    _
  %v75 = vld [vmem:[%s0] sm:$0xf]
  %v76 = vld [vmem:[%s0 + $0x4] sm:$0xf]
  %v77 = vld [vmem:[%s0 + $0x8] sm:$0xf]
  %v78 = vld [vmem:[%s0 + $0xc] sm:$0xf]
  %v79 = vld [vmem:[%s1] sm:$0xf]
  %v80 = vld [vmem:[%s1 + $0x4] sm:$0xf]
  %v81 = vld [vmem:[%s1 + $0x8] sm:$0xf]
  %v82 = vld [vmem:[%s1 + $0xc] sm:$0xf]
  %v83 = vld [vmem:[%s3] sm:$0xf]
  %v84 = vld [vmem:[%s3 + $0x4] sm:$0xf]
  %v85 = vld [vmem:[%s3 + $0x8] sm:$0xf]
  %v86 = vld [vmem:[%s3 + $0xc] sm:$0xf]
  %v87 = vld [vmem:[%s3 + $0x10] sm:$0xf]
  %v88 = vld [vmem:[%s3 + $0x14] sm:$0xf]
  %v89 = vld [vmem:[%s3 + $0x18] sm:$0xf]
  %v90 = vld [vmem:[%s3 + $0x1c] sm:$0xf]
  %v91 = vld [vmem:[%s3 + $0x20] sm:$0xf]
  %v92 = vld [vmem:[%s3 + $0x24] sm:$0xf]
  %v93 = vld [vmem:[%s3 + $0x28] sm:$0xf]
  %v94 = vld [vmem:[%s3 + $0x2c] sm:$0xf]
  %v95 = vld [vmem:[%s3 + $0x30] sm:$0xf]
  %v96 = vld [vmem:[%s3 + $0x34] sm:$0xf]
  %v97 = vld [vmem:[%s3 + $0x38] sm:$0xf]
  %v98 = vld [vmem:[%s3 + $0x3c] sm:$0xf]
  %v103 = vunpack.c.l.b16 %v79
  %v104 = vunpack.c.l.b16 %v80
  %v105 = vunpack.c.l.b16 %v81
  %v106 = vunpack.c.l.b16 %v82
  %v107 = vpack.c.b16 %v104, %v103
  %v108 = vpack.c.b16 %v106, %v105
  %v127 = vunpack.c.l.b16 %v83
  %v128 = vunpack.c.l.b16 %v84
  %v129 = vunpack.c.l.b16 %v85
  %v130 = vunpack.c.l.b16 %v86
  %v131 = vunpack.c.l.b16 %v87
  %v132 = vunpack.c.l.b16 %v88
  %v133 = vunpack.c.l.b16 %v89
  %v134 = vunpack.c.l.b16 %v90
  %v135 = vunpack.c.l.b16 %v91
  %v136 = vunpack.c.l.b16 %v92
  %v137 = vunpack.c.l.b16 %v93
  %v138 = vunpack.c.l.b16 %v94
  %v139 = vunpack.c.l.b16 %v95
  %v140 = vunpack.c.l.b16 %v96
  %v141 = vunpack.c.l.b16 %v97
  %v142 = vunpack.c.l.b16 %v98
  %v143 = vpack.c.b16 %v128, %v127
  %v144 = vpack.c.b16 %v130, %v129
  %v145 = vpack.c.b16 %v132, %v131
  %v146 = vpack.c.b16 %v134, %v133
  %v147 = vpack.c.b16 %v136, %v135
  %v148 = vpack.c.b16 %v138, %v137
  %v149 = vpack.c.b16 %v140, %v139
  %v150 = vpack.c.b16 %v142, %v141
  %159 = vmatprep.subr.bf16.mxu0 0
  %160 = vmatpush1.bf16.msra.mxu0 %v143
  %161 = vmatprep.subr.bf16.mxu0 0
  %162 = vmatpush1.bf16.msra.mxu0 %v144
  %163 = vmatprep.subr.bf16.mxu0 0
  %164 = vmatpush1.bf16.msra.mxu0 %v145
  %165 = vmatprep.subr.bf16.mxu0 0
  %166 = vmatpush1.bf16.msra.mxu0 %v146
  %167 = vmatprep.subr.bf16.mxu0 0
  %168 = vmatpush1.bf16.msra.mxu0 %v147
  %169 = vmatprep.subr.bf16.mxu0 0
  %170 = vmatpush1.bf16.msra.mxu0 %v148
  %171 = vmatprep.subr.bf16.mxu0 0
  %172 = vmatpush1.bf16.msra.mxu0 %v149
  %173 = vmatprep.subr.bf16.mxu0 0
  %174 = vmatpush1.bf16.msra.mxu0 %v150
  %175 = vmatprep.subr.bf16.mxu0 0
  %176 = vmatpush1.bf16.msra.mxu0 0
  %177 = vmatprep.subr.bf16.mxu0 0
  %178 = vmatpush1.bf16.msra.mxu0 0
  %179 = vmatprep.subr.bf16.mxu0 0
  %180 = vmatpush1.bf16.msra.mxu0 0
  %181 = vmatprep.subr.bf16.mxu0 0
  %182 = vmatpush1.bf16.msra.mxu0 0
  %183 = vmatprep.subr.bf16.mxu0 0
  %184 = vmatpush1.bf16.msra.mxu0 0
  %185 = vmatprep.subr.bf16.mxu0 0
  %186 = vmatpush1.bf16.msra.mxu0 0
  %187 = vmatprep.subr.bf16.mxu0 0
  %188 = vmatpush1.bf16.msra.mxu0 0
  %189 = vmatprep.subr.bf16.mxu0 0
  %190 = vmatpush1.bf16.msra.mxu0 0
  %191 = vmatprep.mubr.bf16.mxu0 0
  %192 = vmatmul.mubr.bf16.gmra.mrb[0].mxu0 %v107
  %v193 = vpop.f32.mrb[0].mxu0
  %v194 = vadd.f32 0.0, %v193
  %v195 = vpop.f32.mrb[0].mxu0
  %v196 = vpop.f32.mrb[0].mxu0
  %v197 = vadd.f32 0.0, %v196
  %v198 = vpop.f32.mrb[0].mxu0
  %199 = vmatprep.mubr.bf16.mxu0 0
  %200 = vmatmul.mubr.bf16.gmra.mrb[0].mxu0 %v108
  %v201 = vpop.f32.mrb[0].mxu0
  %v202 = vadd.f32 0.0, %v201
  %v203 = vpop.f32.mrb[0].mxu0
  %v204 = vpop.f32.mrb[0].mxu0
  %v205 = vadd.f32 0.0, %v204
  %v206 = vpop.f32.mrb[0].mxu0
  %207 = vdwg.mxu0
  %v208 = vpack.c.bf16 %v197, %v194
  %v209 = vpack.c.bf16 %v205, %v202
  %v210 = vld [vmem:[%s4] sm:$0x1]
  %v212 = vlaneseq
  %v213 = vshrl.u32 %v212, 7
  %v214 = vsub.s32 0, %v213
  %v215 = vrot.slane %v210, %v214
  %v221 = vunpack.c.l.b16 %v75
  %v222 = vunpack.c.l.b16 %v76
  %v223 = vunpack.c.l.b16 %v77
  %v224 = vunpack.c.l.b16 %v78
  %v225 = vpack.c.b16 %v222, %v221
  %v226 = vpack.c.b16 %v224, %v223
  %vm227 = vcmask 261120
  %v229 = vsel %vm227, %v225, 0
  %v232 = vsel %vm227, %v226, 0
  %234 = vmatprep.subr.bf16.mxu0 0
  %235 = vmatpush1.bf16.msra.mxu0 %v208
  %236 = vmatprep.subr.bf16.mxu0 0
  %237 = vmatpush1.bf16.msra.mxu0 %v209
  %238 = vmatprep.subr.bf16.mxu0 0
  %239 = vmatpush1.bf16.msra.mxu0 0
  %240 = vmatprep.subr.bf16.mxu0 0
  %241 = vmatpush1.bf16.msra.mxu0 0
  %242 = vmatprep.subr.bf16.mxu0 0
  %243 = vmatpush1.bf16.msra.mxu0 0
  %244 = vmatprep.subr.bf16.mxu0 0
  %245 = vmatpush1.bf16.msra.mxu0 0
  %246 = vmatprep.subr.bf16.mxu0 0
  %247 = vmatpush1.bf16.msra.mxu0 0
  %248 = vmatprep.subr.bf16.mxu0 0
  %249 = vmatpush1.bf16.msra.mxu0 0
  %250 = vmatprep.subr.bf16.mxu0 0
  %251 = vmatpush1.bf16.msra.mxu0 0
  %252 = vmatprep.subr.bf16.mxu0 0
  %253 = vmatpush1.bf16.msra.mxu0 0
  %254 = vmatprep.subr.bf16.mxu0 0
  %255 = vmatpush1.bf16.msra.mxu0 0
  %256 = vmatprep.subr.bf16.mxu0 0
  %257 = vmatpush1.bf16.msra.mxu0 0
  %258 = vmatprep.subr.bf16.mxu0 0
  %259 = vmatpush1.bf16.msra.mxu0 0
  %260 = vmatprep.subr.bf16.mxu0 0
  %261 = vmatpush1.bf16.msra.mxu0 0
  %262 = vmatprep.subr.bf16.mxu0 0
  %263 = vmatpush1.bf16.msra.mxu0 0
  %264 = vmatprep.subr.bf16.mxu0 0
  %265 = vmatpush1.bf16.msra.mxu0 0
  %266 = vmatprep.mubr.bf16.mxu0 0
  %267 = vmatmul.mubr.bf16.gmra.mrb[0].mxu0 %v229
  %v268 = vpop.f32.mrb[0].mxu0
  %v269 = vadd.f32 %v215, %v268
  %v270 = vpop.f32.mrb[0].mxu0
  %v271 = vpop.f32.mrb[0].mxu0
  %v272 = vadd.f32 %v215, %v271
  %v273 = vpop.f32.mrb[0].mxu0
  %274 = vmatprep.mubr.bf16.mxu0 0
  %275 = vmatmul.mubr.bf16.gmra.mrb[0].mxu0 %v232
  %v276 = vpop.f32.mrb[0].mxu0
  %v277 = vadd.f32 %v215, %v276
  %v278 = vpop.f32.mrb[0].mxu0
  %v279 = vpop.f32.mrb[0].mxu0
  %v280 = vadd.f32 %v215, %v279
  %v281 = vpop.f32.mrb[0].mxu0
  %282 = vdwg.mxu0
  %v283 = vmax.f32 %v269, 0.0
  %v284 = vmax.f32 %v272, 0.0
  %v285 = vmax.f32 %v277, 0.0
  %v286 = vmax.f32 %v280, 0.0
  %v287 = vadd.f32 %v283, %v284
  %v288 = vadd.f32 %v287, %v285
  %v289 = vadd.f32 %v288, %v286
  %v290 = vrot.slane %v289, 4
  %v291 = vadd.f32 %v289, %v290
  %v292 = vrot.slane %v291, 2
  %v293 = vadd.f32 %v291, %v292
  %v294 = vrot.slane %v293, 1
  %v295 = vadd.f32 %v293, %v294
  %v296 = vmul.f32 %v283, %v283
  %v297 = vmul.f32 %v284, %v284
  %v298 = vmul.f32 %v285, %v285
  %v299 = vmul.f32 %v286, %v286
  %v300 = vadd.f32 %v296, %v297
  %v301 = vadd.f32 %v300, %v298
  %v302 = vadd.f32 %v301, %v299
  %v303 = vrot.slane %v302, 4
  %v304 = vadd.f32 %v302, %v303
  %v305 = vrot.slane %v304, 2
  %v306 = vadd.f32 %v304, %v305
  %v307 = vrot.slane %v306, 1
  %v308 = vadd.f32 %v306, %v307
  %v309 = vmul.f32 %v295, 0.03125
  %v310 = vmul.f32 %v308, 0.03125
  %v311 = vmul.f32 %v309, %v309
  %v312 = vsub.f32 %v310, %v311
  %v313 = vmax.f32 %v312, 0.0
  %v314 = vld [vmem:[%s5] sm:$0x1]
  %v315 = vadd.f32 %v313, 1e-05
  %v316 = vrsqrt.pop %v315
  %v317 = vmul.f32 %v314, %v316
  %v318 = vld [vmem:[%s6] sm:$0x1]
  %v319 = vmul.f32 %v309, %v317
  %v320 = vsub.f32 %v318, %v319
  %v322 = vlaneseq
  %v323 = vshrl.u32 %v322, 7
  %v324 = vsub.s32 0, %v323
  %v325 = vrot.slane %v317, %v324
  %v327 = vmul.f32 %v283, %v325
  %v328 = vmul.f32 %v284, %v325
  %v329 = vmul.f32 %v285, %v325
  %v330 = vmul.f32 %v286, %v325
  %v332 = vlaneseq
  %v333 = vshrl.u32 %v332, 7
  %v334 = vsub.s32 0, %v333
  %v335 = vrot.slane %v320, %v334
  %v337 = vadd.f32 %v327, %v335
  %v338 = vadd.f32 %v328, %v335
  %v339 = vadd.f32 %v329, %v335
  %v340 = vadd.f32 %v330, %v335
  %v341 = vpack.c.bf16 %v338, %v337
  %v342 = vpack.c.bf16 %v340, %v339
  %v343 = vld [vmem:[%s7] sm:$0xf]
  %v344 = vld [vmem:[%s7 + $0x4] sm:$0xf]
  %v345 = vld [vmem:[%s7 + $0x8] sm:$0xf]
  %v346 = vld [vmem:[%s7 + $0xc] sm:$0xf]
  %v347 = vld [vmem:[%s7 + $0x10] sm:$0xf]
  %v348 = vld [vmem:[%s7 + $0x14] sm:$0xf]
  %v349 = vld [vmem:[%s7 + $0x18] sm:$0xf]
  %v350 = vld [vmem:[%s7 + $0x1c] sm:$0xf]
  %v351 = vld [vmem:[%s7 + $0x20] sm:$0xf]
  %v352 = vld [vmem:[%s7 + $0x24] sm:$0xf]
  %v353 = vld [vmem:[%s7 + $0x28] sm:$0xf]
  %v354 = vld [vmem:[%s7 + $0x2c] sm:$0xf]
  %v355 = vld [vmem:[%s7 + $0x30] sm:$0xf]
  %v356 = vld [vmem:[%s7 + $0x34] sm:$0xf]
  %v357 = vld [vmem:[%s7 + $0x38] sm:$0xf]
  %v358 = vld [vmem:[%s7 + $0x3c] sm:$0xf]
  %v375 = vunpack.c.l.b16 %v343
  %v376 = vunpack.c.l.b16 %v344
  %v377 = vunpack.c.l.b16 %v345
  %v378 = vunpack.c.l.b16 %v346
  %v379 = vunpack.c.l.b16 %v347
  %v380 = vunpack.c.l.b16 %v348
  %v381 = vunpack.c.l.b16 %v349
  %v382 = vunpack.c.l.b16 %v350
  %v383 = vunpack.c.l.b16 %v351
  %v384 = vunpack.c.l.b16 %v352
  %v385 = vunpack.c.l.b16 %v353
  %v386 = vunpack.c.l.b16 %v354
  %v387 = vunpack.c.l.b16 %v355
  %v388 = vunpack.c.l.b16 %v356
  %v389 = vunpack.c.l.b16 %v357
  %v390 = vunpack.c.l.b16 %v358
  %v391 = vpack.c.b16 %v376, %v375
  %v392 = vpack.c.b16 %v378, %v377
  %v393 = vpack.c.b16 %v380, %v379
  %v394 = vpack.c.b16 %v382, %v381
  %v395 = vpack.c.b16 %v384, %v383
  %v396 = vpack.c.b16 %v386, %v385
  %v397 = vpack.c.b16 %v388, %v387
  %v398 = vpack.c.b16 %v390, %v389
  %407 = vmatprep.subr.bf16.mxu0 0
  %408 = vmatpush1.bf16.msra.mxu0 %v391
  %409 = vmatprep.subr.bf16.mxu0 0
  %410 = vmatpush1.bf16.msra.mxu0 %v392
  %411 = vmatprep.subr.bf16.mxu0 0
  %412 = vmatpush1.bf16.msra.mxu0 %v393
  %413 = vmatprep.subr.bf16.mxu0 0
  %414 = vmatpush1.bf16.msra.mxu0 %v394
  %415 = vmatprep.subr.bf16.mxu0 0
  %416 = vmatpush1.bf16.msra.mxu0 %v395
  %417 = vmatprep.subr.bf16.mxu0 0
  %418 = vmatpush1.bf16.msra.mxu0 %v396
  %419 = vmatprep.subr.bf16.mxu0 0
  %420 = vmatpush1.bf16.msra.mxu0 %v397
  %421 = vmatprep.subr.bf16.mxu0 0
  %422 = vmatpush1.bf16.msra.mxu0 %v398
  %423 = vmatprep.subr.bf16.mxu0 0
  %424 = vmatpush1.bf16.msra.mxu0 0
  %425 = vmatprep.subr.bf16.mxu0 0
  %426 = vmatpush1.bf16.msra.mxu0 0
  %427 = vmatprep.subr.bf16.mxu0 0
  %428 = vmatpush1.bf16.msra.mxu0 0
  %429 = vmatprep.subr.bf16.mxu0 0
  %430 = vmatpush1.bf16.msra.mxu0 0
  %431 = vmatprep.subr.bf16.mxu0 0
  %432 = vmatpush1.bf16.msra.mxu0 0
  %433 = vmatprep.subr.bf16.mxu0 0
  %434 = vmatpush1.bf16.msra.mxu0 0
  %435 = vmatprep.subr.bf16.mxu0 0
  %436 = vmatpush1.bf16.msra.mxu0 0
  %437 = vmatprep.subr.bf16.mxu0 0
  %438 = vmatpush1.bf16.msra.mxu0 0
  %439 = vmatprep.mubr.bf16.mxu0 0
  %440 = vmatmul.mubr.bf16.gmra.mrb[0].mxu0 %v341
  %v441 = vpop.f32.mrb[0].mxu0
  %v442 = vadd.f32 0.0, %v441
  %v443 = vpop.f32.mrb[0].mxu0
  %v444 = vpop.f32.mrb[0].mxu0
  %v445 = vadd.f32 0.0, %v444
  %v446 = vpop.f32.mrb[0].mxu0
  %447 = vmatprep.mubr.bf16.mxu0 0
  %448 = vmatmul.mubr.bf16.gmra.mrb[0].mxu0 %v342
  %v449 = vpop.f32.mrb[0].mxu0
  %v450 = vadd.f32 0.0, %v449
  %v451 = vpop.f32.mrb[0].mxu0
  %v452 = vpop.f32.mrb[0].mxu0
  %v453 = vadd.f32 0.0, %v452
  %v454 = vpop.f32.mrb[0].mxu0
  %455 = vdwg.mxu0
  %v456 = vpack.c.bf16 %v445, %v442
  %v457 = vpack.c.bf16 %v453, %v450
  %v458 = vld [vmem:[%s8] sm:$0x1]
  %v460 = vlaneseq
  %v461 = vshrl.u32 %v460, 7
  %v462 = vsub.s32 0, %v461
  %v463 = vrot.slane %v458, %v462
  %465 = vmatprep.subr.bf16.mxu0 0
  %466 = vmatpush1.bf16.msra.mxu0 %v456
  %467 = vmatprep.subr.bf16.mxu0 0
  %468 = vmatpush1.bf16.msra.mxu0 %v457
  %469 = vmatprep.subr.bf16.mxu0 0
  %470 = vmatpush1.bf16.msra.mxu0 0
  %471 = vmatprep.subr.bf16.mxu0 0
  %472 = vmatpush1.bf16.msra.mxu0 0
  %473 = vmatprep.subr.bf16.mxu0 0
  %474 = vmatpush1.bf16.msra.mxu0 0
  %475 = vmatprep.subr.bf16.mxu0 0
  %476 = vmatpush1.bf16.msra.mxu0 0
  %477 = vmatprep.subr.bf16.mxu0 0
  %478 = vmatpush1.bf16.msra.mxu0 0
  %479 = vmatprep.subr.bf16.mxu0 0
  %480 = vmatpush1.bf16.msra.mxu0 0
  %481 = vmatprep.subr.bf16.mxu0 0
  %482 = vmatpush1.bf16.msra.mxu0 0
  %483 = vmatprep.subr.bf16.mxu0 0
  %484 = vmatpush1.bf16.msra.mxu0 0
  %485 = vmatprep.subr.bf16.mxu0 0
  %486 = vmatpush1.bf16.msra.mxu0 0
  %487 = vmatprep.subr.bf16.mxu0 0
  %488 = vmatpush1.bf16.msra.mxu0 0
  %489 = vmatprep.subr.bf16.mxu0 0
  %490 = vmatpush1.bf16.msra.mxu0 0
  %491 = vmatprep.subr.bf16.mxu0 0
  %492 = vmatpush1.bf16.msra.mxu0 0
  %493 = vmatprep.subr.bf16.mxu0 0
  %494 = vmatpush1.bf16.msra.mxu0 0
  %495 = vmatprep.subr.bf16.mxu0 0
  %496 = vmatpush1.bf16.msra.mxu0 0
  %497 = vmatprep.mubr.bf16.mxu0 0
  %498 = vmatmul.mubr.bf16.gmra.mrb[0].mxu0 %v229
  %v499 = vpop.f32.mrb[0].mxu0
  %v500 = vadd.f32 %v463, %v499
  %v501 = vpop.f32.mrb[0].mxu0
  %v502 = vpop.f32.mrb[0].mxu0
  %v503 = vadd.f32 %v463, %v502
  %v504 = vpop.f32.mrb[0].mxu0
  %505 = vmatprep.mubr.bf16.mxu0 0
  %506 = vmatmul.mubr.bf16.gmra.mrb[0].mxu0 %v232
  %v507 = vpop.f32.mrb[0].mxu0
  %v508 = vadd.f32 %v463, %v507
  %v509 = vpop.f32.mrb[0].mxu0
  %v510 = vpop.f32.mrb[0].mxu0
  %v511 = vadd.f32 %v463, %v510
  %v512 = vpop.f32.mrb[0].mxu0
  %513 = vdwg.mxu0
  %v514 = vmax.f32 %v500, 0.0
  %v515 = vmax.f32 %v503, 0.0
  %v516 = vmax.f32 %v508, 0.0
  %v517 = vmax.f32 %v511, 0.0
  %v518 = vadd.f32 %v514, %v515
  %v519 = vadd.f32 %v518, %v516
  %v520 = vadd.f32 %v519, %v517
  %v521 = vrot.slane %v520, 4
  %v522 = vadd.f32 %v520, %v521
  %v523 = vrot.slane %v522, 2
  %v524 = vadd.f32 %v522, %v523
  %v525 = vrot.slane %v524, 1
  %v526 = vadd.f32 %v524, %v525
  %v527 = vmul.f32 %v514, %v514
  %v528 = vmul.f32 %v515, %v515
  %v529 = vmul.f32 %v516, %v516
  %v530 = vmul.f32 %v517, %v517
  %v531 = vadd.f32 %v527, %v528
  %v532 = vadd.f32 %v531, %v529
  %v533 = vadd.f32 %v532, %v530
  %v534 = vrot.slane %v533, 4
  %v535 = vadd.f32 %v533, %v534
  %v536 = vrot.slane %v535, 2
  %v537 = vadd.f32 %v535, %v536
  %v538 = vrot.slane %v537, 1
  %v539 = vadd.f32 %v537, %v538
  %v540 = vmul.f32 %v526, 0.03125
  %v541 = vmul.f32 %v539, 0.03125
  %v542 = vmul.f32 %v540, %v540
  %v543 = vsub.f32 %v541, %v542
  %v544 = vmax.f32 %v543, 0.0
  %v545 = vld [vmem:[%s9] sm:$0x1]
  %v546 = vadd.f32 %v544, 1e-05
  %v547 = vrsqrt.pop %v546
  %v548 = vmul.f32 %v545, %v547
  %v549 = vld [vmem:[%s10] sm:$0x1]
  %v550 = vmul.f32 %v540, %v548
  %v551 = vsub.f32 %v549, %v550
  %v553 = vlaneseq
  %v554 = vshrl.u32 %v553, 7
  %v555 = vsub.s32 0, %v554
  %v556 = vrot.slane %v548, %v555
  %v558 = vmul.f32 %v514, %v556
  %v559 = vmul.f32 %v515, %v556
  %v560 = vmul.f32 %v516, %v556
  %v561 = vmul.f32 %v517, %v556
  %v563 = vlaneseq
  %v564 = vshrl.u32 %v563, 7
  %v565 = vsub.s32 0, %v564
  %v566 = vrot.slane %v551, %v565
  %v568 = vadd.f32 %v558, %v566
  %v569 = vadd.f32 %v559, %v566
  %v570 = vadd.f32 %v560, %v566
  %v571 = vadd.f32 %v561, %v566
  %v572 = vpack.c.bf16 %v569, %v568
  %v573 = vpack.c.bf16 %v571, %v570
  %v574 = vld [vmem:[%s11] sm:$0xf]
  %v575 = vld [vmem:[%s11 + $0x4] sm:$0xf]
  %v576 = vld [vmem:[%s11 + $0x8] sm:$0xf]
  %v577 = vld [vmem:[%s11 + $0xc] sm:$0xf]
  %v578 = vld [vmem:[%s11 + $0x10] sm:$0xf]
  %v579 = vld [vmem:[%s11 + $0x14] sm:$0xf]
  %v580 = vld [vmem:[%s11 + $0x18] sm:$0xf]
  %v581 = vld [vmem:[%s11 + $0x1c] sm:$0xf]
  %v582 = vld [vmem:[%s11 + $0x20] sm:$0xf]
  %v583 = vld [vmem:[%s11 + $0x24] sm:$0xf]
  %v584 = vld [vmem:[%s11 + $0x28] sm:$0xf]
  %v585 = vld [vmem:[%s11 + $0x2c] sm:$0xf]
  %v586 = vld [vmem:[%s11 + $0x30] sm:$0xf]
  %v587 = vld [vmem:[%s11 + $0x34] sm:$0xf]
  %v588 = vld [vmem:[%s11 + $0x38] sm:$0xf]
  %v589 = vld [vmem:[%s11 + $0x3c] sm:$0xf]
  %v606 = vunpack.c.l.b16 %v574
  %v607 = vunpack.c.l.b16 %v575
  %v608 = vunpack.c.l.b16 %v576
  %v609 = vunpack.c.l.b16 %v577
  %v610 = vunpack.c.l.b16 %v578
  %v611 = vunpack.c.l.b16 %v579
  %v612 = vunpack.c.l.b16 %v580
  %v613 = vunpack.c.l.b16 %v581
  %v614 = vunpack.c.l.b16 %v582
  %v615 = vunpack.c.l.b16 %v583
  %v616 = vunpack.c.l.b16 %v584
  %v617 = vunpack.c.l.b16 %v585
  %v618 = vunpack.c.l.b16 %v586
  %v619 = vunpack.c.l.b16 %v587
  %v620 = vunpack.c.l.b16 %v588
  %v621 = vunpack.c.l.b16 %v589
  %v622 = vpack.c.b16 %v607, %v606
  %v623 = vpack.c.b16 %v609, %v608
  %v624 = vpack.c.b16 %v611, %v610
  %v625 = vpack.c.b16 %v613, %v612
  %v626 = vpack.c.b16 %v615, %v614
  %v627 = vpack.c.b16 %v617, %v616
  %v628 = vpack.c.b16 %v619, %v618
  %v629 = vpack.c.b16 %v621, %v620
  %638 = vmatprep.subr.bf16.mxu0 0
  %639 = vmatpush1.bf16.msra.mxu0 %v622
  %640 = vmatprep.subr.bf16.mxu0 0
  %641 = vmatpush1.bf16.msra.mxu0 %v623
  %642 = vmatprep.subr.bf16.mxu0 0
  %643 = vmatpush1.bf16.msra.mxu0 %v624
  %644 = vmatprep.subr.bf16.mxu0 0
  %645 = vmatpush1.bf16.msra.mxu0 %v625
  %646 = vmatprep.subr.bf16.mxu0 0
  %647 = vmatpush1.bf16.msra.mxu0 %v626
  %648 = vmatprep.subr.bf16.mxu0 0
  %649 = vmatpush1.bf16.msra.mxu0 %v627
  %650 = vmatprep.subr.bf16.mxu0 0
  %651 = vmatpush1.bf16.msra.mxu0 %v628
  %652 = vmatprep.subr.bf16.mxu0 0
  %653 = vmatpush1.bf16.msra.mxu0 %v629
  %654 = vmatprep.subr.bf16.mxu0 0
  %655 = vmatpush1.bf16.msra.mxu0 0
  %656 = vmatprep.subr.bf16.mxu0 0
  %657 = vmatpush1.bf16.msra.mxu0 0
  %658 = vmatprep.subr.bf16.mxu0 0
  %659 = vmatpush1.bf16.msra.mxu0 0
  %660 = vmatprep.subr.bf16.mxu0 0
  %661 = vmatpush1.bf16.msra.mxu0 0
  %662 = vmatprep.subr.bf16.mxu0 0
  %663 = vmatpush1.bf16.msra.mxu0 0
  %664 = vmatprep.subr.bf16.mxu0 0
  %665 = vmatpush1.bf16.msra.mxu0 0
  %666 = vmatprep.subr.bf16.mxu0 0
  %667 = vmatpush1.bf16.msra.mxu0 0
  %668 = vmatprep.subr.bf16.mxu0 0
  %669 = vmatpush1.bf16.msra.mxu0 0
  %670 = vmatprep.mubr.bf16.mxu0 0
  %671 = vmatmul.mubr.bf16.gmra.mrb[0].mxu0 %v572
  %v672 = vpop.f32.mrb[0].mxu0
  %v673 = vadd.f32 0.0, %v672
  %v674 = vpop.f32.mrb[0].mxu0
  %v675 = vpop.f32.mrb[0].mxu0
  %v676 = vadd.f32 0.0, %v675
  %v677 = vpop.f32.mrb[0].mxu0
  %678 = vmatprep.mubr.bf16.mxu0 0
  %679 = vmatmul.mubr.bf16.gmra.mrb[0].mxu0 %v573
  %v680 = vpop.f32.mrb[0].mxu0
  %v681 = vadd.f32 0.0, %v680
  %v682 = vpop.f32.mrb[0].mxu0
  %v683 = vpop.f32.mrb[0].mxu0
  %v684 = vadd.f32 0.0, %v683
  %v685 = vpop.f32.mrb[0].mxu0
  %686 = vdwg.mxu0
  %v687 = vpack.c.bf16 %v676, %v673
  %v688 = vpack.c.bf16 %v684, %v681
  %v689 = vld [vmem:[%s12] sm:$0x1]
  %v691 = vlaneseq
  %v692 = vshrl.u32 %v691, 7
  %v693 = vsub.s32 0, %v692
  %v694 = vrot.slane %v689, %v693
  %696 = vmatprep.subr.bf16.mxu0 0
  %697 = vmatpush1.bf16.msra.mxu0 %v687
  %698 = vmatprep.subr.bf16.mxu0 0
  %699 = vmatpush1.bf16.msra.mxu0 %v688
  %700 = vmatprep.subr.bf16.mxu0 0
  %701 = vmatpush1.bf16.msra.mxu0 0
  %702 = vmatprep.subr.bf16.mxu0 0
  %703 = vmatpush1.bf16.msra.mxu0 0
  %704 = vmatprep.subr.bf16.mxu0 0
  %705 = vmatpush1.bf16.msra.mxu0 0
  %706 = vmatprep.subr.bf16.mxu0 0
  %707 = vmatpush1.bf16.msra.mxu0 0
  %708 = vmatprep.subr.bf16.mxu0 0
  %709 = vmatpush1.bf16.msra.mxu0 0
  %710 = vmatprep.subr.bf16.mxu0 0
  %711 = vmatpush1.bf16.msra.mxu0 0
  %712 = vmatprep.subr.bf16.mxu0 0
  %713 = vmatpush1.bf16.msra.mxu0 0
  %714 = vmatprep.subr.bf16.mxu0 0
  %715 = vmatpush1.bf16.msra.mxu0 0
  %716 = vmatprep.subr.bf16.mxu0 0
  %717 = vmatpush1.bf16.msra.mxu0 0
  %718 = vmatprep.subr.bf16.mxu0 0
  %719 = vmatpush1.bf16.msra.mxu0 0
  %720 = vmatprep.subr.bf16.mxu0 0
  %721 = vmatpush1.bf16.msra.mxu0 0
  %722 = vmatprep.subr.bf16.mxu0 0
  %723 = vmatpush1.bf16.msra.mxu0 0
  %724 = vmatprep.subr.bf16.mxu0 0
  %725 = vmatpush1.bf16.msra.mxu0 0
  %726 = vmatprep.subr.bf16.mxu0 0
  %727 = vmatpush1.bf16.msra.mxu0 0
  %728 = vmatprep.mubr.bf16.mxu0 0
  %729 = vmatmul.mubr.bf16.gmra.mrb[0].mxu0 %v229
  %v730 = vpop.f32.mrb[0].mxu0
  %v731 = vadd.f32 %v694, %v730
  %v732 = vpop.f32.mrb[0].mxu0
  %v733 = vpop.f32.mrb[0].mxu0
  %v734 = vadd.f32 %v694, %v733
  %v735 = vpop.f32.mrb[0].mxu0
  %736 = vmatprep.mubr.bf16.mxu0 0
  %737 = vmatmul.mubr.bf16.gmra.mrb[0].mxu0 %v232
  %v738 = vpop.f32.mrb[0].mxu0
  %v739 = vadd.f32 %v694, %v738
  %v740 = vpop.f32.mrb[0].mxu0
  %v741 = vpop.f32.mrb[0].mxu0
  %v742 = vadd.f32 %v694, %v741
  %v743 = vpop.f32.mrb[0].mxu0
  %744 = vdwg.mxu0
  %v745 = vmax.f32 %v731, 0.0
  %v746 = vmax.f32 %v734, 0.0
  %v747 = vmax.f32 %v739, 0.0
  %v748 = vmax.f32 %v742, 0.0
  %v749 = vadd.f32 %v745, %v746
  %v750 = vadd.f32 %v749, %v747
  %v751 = vadd.f32 %v750, %v748
  %v752 = vrot.slane %v751, 4
  %v753 = vadd.f32 %v751, %v752
  %v754 = vrot.slane %v753, 2
  %v755 = vadd.f32 %v753, %v754
  %v756 = vrot.slane %v755, 1
  %v757 = vadd.f32 %v755, %v756
  %v758 = vmul.f32 %v745, %v745
  %v759 = vmul.f32 %v746, %v746
  %v760 = vmul.f32 %v747, %v747
  %v761 = vmul.f32 %v748, %v748
  %v762 = vadd.f32 %v758, %v759
  %v763 = vadd.f32 %v762, %v760
  %v764 = vadd.f32 %v763, %v761
  %v765 = vrot.slane %v764, 4
  %v766 = vadd.f32 %v764, %v765
  %v767 = vrot.slane %v766, 2
  %v768 = vadd.f32 %v766, %v767
  %v769 = vrot.slane %v768, 1
  %v770 = vadd.f32 %v768, %v769
  %v771 = vmul.f32 %v757, 0.03125
  %v772 = vmul.f32 %v770, 0.03125
  %v773 = vmul.f32 %v771, %v771
  %v774 = vsub.f32 %v772, %v773
  %v775 = vmax.f32 %v774, 0.0
  %v776 = vld [vmem:[%s13] sm:$0x1]
  %v777 = vadd.f32 %v775, 1e-05
  %v778 = vrsqrt.pop %v777
  %v779 = vmul.f32 %v776, %v778
  %v780 = vld [vmem:[%s14] sm:$0x1]
  %v781 = vmul.f32 %v771, %v779
  %v782 = vsub.f32 %v780, %v781
  %v784 = vlaneseq
  %v785 = vshrl.u32 %v784, 7
  %v786 = vsub.s32 0, %v785
  %v787 = vrot.slane %v779, %v786
  %v789 = vmul.f32 %v745, %v787
  %v790 = vmul.f32 %v746, %v787
  %v791 = vmul.f32 %v747, %v787
  %v792 = vmul.f32 %v748, %v787
  %v794 = vlaneseq
  %v795 = vshrl.u32 %v794, 7
  %v796 = vsub.s32 0, %v795
  %v797 = vrot.slane %v782, %v796
  %v799 = vadd.f32 %v789, %v797
  %v800 = vadd.f32 %v790, %v797
  %v801 = vadd.f32 %v791, %v797
  %v802 = vadd.f32 %v792, %v797
  %v803 = vpack.c.bf16 %v800, %v799
  %v804 = vpack.c.bf16 %v802, %v801
  %v805 = vld [vmem:[%s15] sm:$0xf]
  %v806 = vld [vmem:[%s15 + $0x4] sm:$0xf]
  %v807 = vld [vmem:[%s15 + $0x8] sm:$0xf]
  %v808 = vld [vmem:[%s15 + $0xc] sm:$0xf]
  %v809 = vld [vmem:[%s15 + $0x10] sm:$0xf]
  %v810 = vld [vmem:[%s15 + $0x14] sm:$0xf]
  %v811 = vld [vmem:[%s15 + $0x18] sm:$0xf]
  %v812 = vld [vmem:[%s15 + $0x1c] sm:$0xf]
  %v813 = vld [vmem:[%s15 + $0x20] sm:$0xf]
  %v814 = vld [vmem:[%s15 + $0x24] sm:$0xf]
  %v815 = vld [vmem:[%s15 + $0x28] sm:$0xf]
  %v816 = vld [vmem:[%s15 + $0x2c] sm:$0xf]
  %v817 = vld [vmem:[%s15 + $0x30] sm:$0xf]
  %v818 = vld [vmem:[%s15 + $0x34] sm:$0xf]
  %v819 = vld [vmem:[%s15 + $0x38] sm:$0xf]
  %v820 = vld [vmem:[%s15 + $0x3c] sm:$0xf]
  %v837 = vunpack.c.l.b16 %v805
  %v838 = vunpack.c.l.b16 %v806
  %v839 = vunpack.c.l.b16 %v807
  %v840 = vunpack.c.l.b16 %v808
  %v841 = vunpack.c.l.b16 %v809
  %v842 = vunpack.c.l.b16 %v810
  %v843 = vunpack.c.l.b16 %v811
  %v844 = vunpack.c.l.b16 %v812
  %v845 = vunpack.c.l.b16 %v813
  %v846 = vunpack.c.l.b16 %v814
  %v847 = vunpack.c.l.b16 %v815
  %v848 = vunpack.c.l.b16 %v816
  %v849 = vunpack.c.l.b16 %v817
  %v850 = vunpack.c.l.b16 %v818
  %v851 = vunpack.c.l.b16 %v819
  %v852 = vunpack.c.l.b16 %v820
  %v853 = vpack.c.b16 %v838, %v837
  %v854 = vpack.c.b16 %v840, %v839
  %v855 = vpack.c.b16 %v842, %v841
  %v856 = vpack.c.b16 %v844, %v843
  %v857 = vpack.c.b16 %v846, %v845
  %v858 = vpack.c.b16 %v848, %v847
  %v859 = vpack.c.b16 %v850, %v849
  %v860 = vpack.c.b16 %v852, %v851
  %869 = vmatprep.subr.bf16.mxu0 0
  %870 = vmatpush1.bf16.msra.mxu0 %v853
  %871 = vmatprep.subr.bf16.mxu0 0
  %872 = vmatpush1.bf16.msra.mxu0 %v854
  %873 = vmatprep.subr.bf16.mxu0 0
  %874 = vmatpush1.bf16.msra.mxu0 %v855
  %875 = vmatprep.subr.bf16.mxu0 0
  %876 = vmatpush1.bf16.msra.mxu0 %v856
  %877 = vmatprep.subr.bf16.mxu0 0
  %878 = vmatpush1.bf16.msra.mxu0 %v857
  %879 = vmatprep.subr.bf16.mxu0 0
  %880 = vmatpush1.bf16.msra.mxu0 %v858
  %881 = vmatprep.subr.bf16.mxu0 0
  %882 = vmatpush1.bf16.msra.mxu0 %v859
  %883 = vmatprep.subr.bf16.mxu0 0
  %884 = vmatpush1.bf16.msra.mxu0 %v860
  %885 = vmatprep.subr.bf16.mxu0 0
  %886 = vmatpush1.bf16.msra.mxu0 0
  %887 = vmatprep.subr.bf16.mxu0 0
  %888 = vmatpush1.bf16.msra.mxu0 0
  %889 = vmatprep.subr.bf16.mxu0 0
  %890 = vmatpush1.bf16.msra.mxu0 0
  %891 = vmatprep.subr.bf16.mxu0 0
  %892 = vmatpush1.bf16.msra.mxu0 0
  %893 = vmatprep.subr.bf16.mxu0 0
  %894 = vmatpush1.bf16.msra.mxu0 0
  %895 = vmatprep.subr.bf16.mxu0 0
  %896 = vmatpush1.bf16.msra.mxu0 0
  %897 = vmatprep.subr.bf16.mxu0 0
  %898 = vmatpush1.bf16.msra.mxu0 0
  %899 = vmatprep.subr.bf16.mxu0 0
  %900 = vmatpush1.bf16.msra.mxu0 0
  %901 = vmatprep.mubr.bf16.mxu0 0
  %902 = vmatmul.mubr.bf16.gmra.mrb[0].mxu0 %v803
  %v903 = vpop.f32.mrb[0].mxu0
  %v904 = vadd.f32 0.0, %v903
  %v905 = vpop.f32.mrb[0].mxu0
  %v906 = vpop.f32.mrb[0].mxu0
  %v907 = vadd.f32 0.0, %v906
  %v908 = vpop.f32.mrb[0].mxu0
  %909 = vmatprep.mubr.bf16.mxu0 0
  %910 = vmatmul.mubr.bf16.gmra.mrb[0].mxu0 %v804
  %v911 = vpop.f32.mrb[0].mxu0
  %v912 = vadd.f32 0.0, %v911
  %v913 = vpop.f32.mrb[0].mxu0
  %v914 = vpop.f32.mrb[0].mxu0
  %v915 = vadd.f32 0.0, %v914
  %v916 = vpop.f32.mrb[0].mxu0
  %917 = vdwg.mxu0
  %v918 = vpack.c.bf16 %v907, %v904
  %v919 = vpack.c.bf16 %v915, %v912
  %v920 = vld [vmem:[%s16] sm:$0x1]
  %v922 = vlaneseq
  %v923 = vshrl.u32 %v922, 7
  %v924 = vsub.s32 0, %v923
  %v925 = vrot.slane %v920, %v924
  %927 = vmatprep.subr.bf16.mxu0 0
  %928 = vmatpush1.bf16.msra.mxu0 %v918
  %929 = vmatprep.subr.bf16.mxu0 0
  %930 = vmatpush1.bf16.msra.mxu0 %v919
  %931 = vmatprep.subr.bf16.mxu0 0
  %932 = vmatpush1.bf16.msra.mxu0 0
  %933 = vmatprep.subr.bf16.mxu0 0
  %934 = vmatpush1.bf16.msra.mxu0 0
  %935 = vmatprep.subr.bf16.mxu0 0
  %936 = vmatpush1.bf16.msra.mxu0 0
  %937 = vmatprep.subr.bf16.mxu0 0
  %938 = vmatpush1.bf16.msra.mxu0 0
  %939 = vmatprep.subr.bf16.mxu0 0
  %940 = vmatpush1.bf16.msra.mxu0 0
  %941 = vmatprep.subr.bf16.mxu0 0
  %942 = vmatpush1.bf16.msra.mxu0 0
  %943 = vmatprep.subr.bf16.mxu0 0
  %944 = vmatpush1.bf16.msra.mxu0 0
  %945 = vmatprep.subr.bf16.mxu0 0
  %946 = vmatpush1.bf16.msra.mxu0 0
  %947 = vmatprep.subr.bf16.mxu0 0
  %948 = vmatpush1.bf16.msra.mxu0 0
  %949 = vmatprep.subr.bf16.mxu0 0
  %950 = vmatpush1.bf16.msra.mxu0 0
  %951 = vmatprep.subr.bf16.mxu0 0
  %952 = vmatpush1.bf16.msra.mxu0 0
  %953 = vmatprep.subr.bf16.mxu0 0
  %954 = vmatpush1.bf16.msra.mxu0 0
  %955 = vmatprep.subr.bf16.mxu0 0
  %956 = vmatpush1.bf16.msra.mxu0 0
  %957 = vmatprep.subr.bf16.mxu0 0
  %958 = vmatpush1.bf16.msra.mxu0 0
  %959 = vmatprep.mubr.bf16.mxu0 0
  %960 = vmatmul.mubr.bf16.gmra.mrb[0].mxu0 %v229
  %v961 = vpop.f32.mrb[0].mxu0
  %v962 = vadd.f32 %v925, %v961
  %v963 = vpop.f32.mrb[0].mxu0
  %v964 = vpop.f32.mrb[0].mxu0
  %v965 = vadd.f32 %v925, %v964
  %v966 = vpop.f32.mrb[0].mxu0
  %967 = vmatprep.mubr.bf16.mxu0 0
  %968 = vmatmul.mubr.bf16.gmra.mrb[0].mxu0 %v232
  %v969 = vpop.f32.mrb[0].mxu0
  %v970 = vadd.f32 %v925, %v969
  %v971 = vpop.f32.mrb[0].mxu0
  %v972 = vpop.f32.mrb[0].mxu0
  %v973 = vadd.f32 %v925, %v972
  %v974 = vpop.f32.mrb[0].mxu0
  %975 = vdwg.mxu0
  %v976 = vmax.f32 %v962, 0.0
  %v977 = vmax.f32 %v965, 0.0
  %v978 = vmax.f32 %v970, 0.0
  %v979 = vmax.f32 %v973, 0.0
  %v980 = vadd.f32 %v976, %v977
  %v981 = vadd.f32 %v980, %v978
  %v982 = vadd.f32 %v981, %v979
  %v983 = vrot.slane %v982, 4
  %v984 = vadd.f32 %v982, %v983
  %v985 = vrot.slane %v984, 2
  %v986 = vadd.f32 %v984, %v985
  %v987 = vrot.slane %v986, 1
  %v988 = vadd.f32 %v986, %v987
  %v989 = vmul.f32 %v976, %v976
  %v990 = vmul.f32 %v977, %v977
  %v991 = vmul.f32 %v978, %v978
  %v992 = vmul.f32 %v979, %v979
  %v993 = vadd.f32 %v989, %v990
  %v994 = vadd.f32 %v993, %v991
  %v995 = vadd.f32 %v994, %v992
  %v996 = vrot.slane %v995, 4
  %v997 = vadd.f32 %v995, %v996
  %v998 = vrot.slane %v997, 2
  %v999 = vadd.f32 %v997, %v998
  %v1000 = vrot.slane %v999, 1
  %v1001 = vadd.f32 %v999, %v1000
  %v1002 = vmul.f32 %v988, 0.03125
  %v1003 = vmul.f32 %v1001, 0.03125
  %v1004 = vmul.f32 %v1002, %v1002
  %v1005 = vsub.f32 %v1003, %v1004
  %v1006 = vmax.f32 %v1005, 0.0
  %v1007 = vld [vmem:[%s17] sm:$0x1]
  %v1008 = vadd.f32 %v1006, 1e-05
  %v1009 = vrsqrt.pop %v1008
  %v1010 = vmul.f32 %v1007, %v1009
  %v1011 = vld [vmem:[%s18] sm:$0x1]
  %v1012 = vmul.f32 %v1002, %v1010
  %v1013 = vsub.f32 %v1011, %v1012
  %v1015 = vlaneseq
  %v1016 = vshrl.u32 %v1015, 7
  %v1017 = vsub.s32 0, %v1016
  %v1018 = vrot.slane %v1010, %v1017
  %v1020 = vmul.f32 %v976, %v1018
  %v1021 = vmul.f32 %v977, %v1018
  %v1022 = vmul.f32 %v978, %v1018
  %v1023 = vmul.f32 %v979, %v1018
  %v1025 = vlaneseq
  %v1026 = vshrl.u32 %v1025, 7
  %v1027 = vsub.s32 0, %v1026
  %v1028 = vrot.slane %v1013, %v1027
  %v1030 = vadd.f32 %v1020, %v1028
  %v1031 = vadd.f32 %v1021, %v1028
  %v1032 = vadd.f32 %v1022, %v1028
  %v1033 = vadd.f32 %v1023, %v1028
  %v1034 = vpack.c.bf16 %v1031, %v1030
  %v1035 = vpack.c.bf16 %v1033, %v1032
  %v1036 = vld [vmem:[%s2] sm:$0xf]
  %v1038 = vsel %vm227, %v1036, 0
  %1040 = vmatprep.subr.bf16.mxu0 0
  %1041 = vmatpush1.bf16.msra.mxu0 %v1034
  %1042 = vmatprep.subr.bf16.mxu0 0
  %1043 = vmatpush1.bf16.msra.mxu0 %v1035
  %1044 = vmatprep.subr.bf16.mxu0 0
  %1045 = vmatpush1.bf16.msra.mxu0 0
  %1046 = vmatprep.subr.bf16.mxu0 0
  %1047 = vmatpush1.bf16.msra.mxu0 0
  %1048 = vmatprep.subr.bf16.mxu0 0
  %1049 = vmatpush1.bf16.msra.mxu0 0
  %1050 = vmatprep.subr.bf16.mxu0 0
  %1051 = vmatpush1.bf16.msra.mxu0 0
  %1052 = vmatprep.subr.bf16.mxu0 0
  %1053 = vmatpush1.bf16.msra.mxu0 0
  %1054 = vmatprep.subr.bf16.mxu0 0
  %1055 = vmatpush1.bf16.msra.mxu0 0
  %1056 = vmatprep.subr.bf16.mxu0 0
  %1057 = vmatpush1.bf16.msra.mxu0 0
  %1058 = vmatprep.subr.bf16.mxu0 0
  %1059 = vmatpush1.bf16.msra.mxu0 0
  %1060 = vmatprep.subr.bf16.mxu0 0
  %1061 = vmatpush1.bf16.msra.mxu0 0
  %1062 = vmatprep.subr.bf16.mxu0 0
  %1063 = vmatpush1.bf16.msra.mxu0 0
  %1064 = vmatprep.subr.bf16.mxu0 0
  %1065 = vmatpush1.bf16.msra.mxu0 0
  %1066 = vmatprep.subr.bf16.mxu0 0
  %1067 = vmatpush1.bf16.msra.mxu0 0
  %1068 = vmatprep.subr.bf16.mxu0 0
  %1069 = vmatpush1.bf16.msra.mxu0 0
  %1070 = vmatprep.subr.bf16.mxu0 0
  %1071 = vmatpush1.bf16.msra.mxu0 0
  %1072 = vmatprep.mubr.bf16.mxu0 0
  %1073 = vmatmul.mubr.bf16.gmra.mrb[0].mxu0 %v1038
  %v1074 = vpop.f32.mrb[0].mxu0
  %v1075 = vadd.f32 0.0, %v1074
  %v1076 = vpop.f32.mrb[0].mxu0
  %v1077 = vpop.f32.mrb[0].mxu0
  %v1078 = vpop.f32.mrb[0].mxu0
  %1079 = vdwg.mxu0
  %v1080 = vpack.c.bf16 %v1075, %v1075
  %v1081 = vld [vmem:[%s19] sm:$0xf]
  %v1082 = vld [vmem:[%s19 + $0x4] sm:$0xf]
  %v1083 = vld [vmem:[%s19 + $0x8] sm:$0xf]
  %v1084 = vld [vmem:[%s19 + $0xc] sm:$0xf]
  %v1085 = vld [vmem:[%s19 + $0x10] sm:$0xf]
  %v1086 = vld [vmem:[%s19 + $0x14] sm:$0xf]
  %v1087 = vld [vmem:[%s19 + $0x18] sm:$0xf]
  %v1088 = vld [vmem:[%s19 + $0x1c] sm:$0xf]
  %v1089 = vld [vmem:[%s19 + $0x20] sm:$0xf]
  %v1090 = vld [vmem:[%s19 + $0x24] sm:$0xf]
  %v1091 = vld [vmem:[%s19 + $0x28] sm:$0xf]
  %v1092 = vld [vmem:[%s19 + $0x2c] sm:$0xf]
  %v1093 = vld [vmem:[%s19 + $0x30] sm:$0xf]
  %v1094 = vld [vmem:[%s19 + $0x34] sm:$0xf]
  %v1095 = vld [vmem:[%s19 + $0x38] sm:$0xf]
  %v1096 = vld [vmem:[%s19 + $0x3c] sm:$0xf]
  %v1097 = vld [vmem:[%s20] sm:$0x1]
  %v1099 = vlaneseq
  %v1100 = vshrl.u32 %v1099, 7
  %v1101 = vsub.s32 0, %v1100
  %v1102 = vrot.slane %v1097, %v1101
  %v1120 = vunpack.c.l.b16 %v1081
  %v1121 = vunpack.c.l.b16 %v1082
  %v1122 = vunpack.c.l.b16 %v1083
  %v1123 = vunpack.c.l.b16 %v1084
  %v1124 = vunpack.c.l.b16 %v1085
  %v1125 = vunpack.c.l.b16 %v1086
  %v1126 = vunpack.c.l.b16 %v1087
  %v1127 = vunpack.c.l.b16 %v1088
  %v1128 = vunpack.c.l.b16 %v1089
  %v1129 = vunpack.c.l.b16 %v1090
  %v1130 = vunpack.c.l.b16 %v1091
  %v1131 = vunpack.c.l.b16 %v1092
  %v1132 = vunpack.c.l.b16 %v1093
  %v1133 = vunpack.c.l.b16 %v1094
  %v1134 = vunpack.c.l.b16 %v1095
  %v1135 = vunpack.c.l.b16 %v1096
  %v1136 = vpack.c.b16 %v1121, %v1120
  %v1137 = vpack.c.b16 %v1123, %v1122
  %v1138 = vpack.c.b16 %v1125, %v1124
  %v1139 = vpack.c.b16 %v1127, %v1126
  %v1140 = vpack.c.b16 %v1129, %v1128
  %v1141 = vpack.c.b16 %v1131, %v1130
  %v1142 = vpack.c.b16 %v1133, %v1132
  %v1143 = vpack.c.b16 %v1135, %v1134
  %1152 = vmatprep.subr.bf16.mxu0 0
  %1153 = vmatpush1.bf16.msra.mxu0 %v1136
  %1154 = vmatprep.subr.bf16.mxu0 0
  %1155 = vmatpush1.bf16.msra.mxu0 %v1137
  %1156 = vmatprep.subr.bf16.mxu0 0
  %1157 = vmatpush1.bf16.msra.mxu0 %v1138
  %1158 = vmatprep.subr.bf16.mxu0 0
  %1159 = vmatpush1.bf16.msra.mxu0 %v1139
  %1160 = vmatprep.subr.bf16.mxu0 0
  %1161 = vmatpush1.bf16.msra.mxu0 %v1140
  %1162 = vmatprep.subr.bf16.mxu0 0
  %1163 = vmatpush1.bf16.msra.mxu0 %v1141
  %1164 = vmatprep.subr.bf16.mxu0 0
  %1165 = vmatpush1.bf16.msra.mxu0 %v1142
  %1166 = vmatprep.subr.bf16.mxu0 0
  %1167 = vmatpush1.bf16.msra.mxu0 %v1143
  %1168 = vmatprep.subr.bf16.mxu0 0
  %1169 = vmatpush1.bf16.msra.mxu0 0
  %1170 = vmatprep.subr.bf16.mxu0 0
  %1171 = vmatpush1.bf16.msra.mxu0 0
  %1172 = vmatprep.subr.bf16.mxu0 0
  %1173 = vmatpush1.bf16.msra.mxu0 0
  %1174 = vmatprep.subr.bf16.mxu0 0
  %1175 = vmatpush1.bf16.msra.mxu0 0
  %1176 = vmatprep.subr.bf16.mxu0 0
  %1177 = vmatpush1.bf16.msra.mxu0 0
  %1178 = vmatprep.subr.bf16.mxu0 0
  %1179 = vmatpush1.bf16.msra.mxu0 0
  %1180 = vmatprep.subr.bf16.mxu0 0
  %1181 = vmatpush1.bf16.msra.mxu0 0
  %1182 = vmatprep.subr.bf16.mxu0 0
  %1183 = vmatpush1.bf16.msra.mxu0 0
  %1184 = vmatprep.mubr.bf16.mxu0 0
  %1185 = vmatmul.mubr.bf16.gmra.mrb[0].mxu0 %v1080
  %v1186 = vpop.f32.mrb[0].mxu0
  %v1187 = vadd.f32 %v1102, %v1186
  %v1188 = vpop.f32.mrb[0].mxu0
  %v1189 = vpop.f32.mrb[0].mxu0
  %v1190 = vpop.f32.mrb[0].mxu0
  %1191 = vdwg.mxu0
  %v1192 = vmax.f32 %v1187, 0.0
  %v1193 = vpack.c.bf16 %v1192, %v1192
  %v1194 = vld [vmem:[%s21] sm:$0xf]
  %v1195 = vld [vmem:[%s21 + $0x4] sm:$0xf]
  %v1196 = vld [vmem:[%s21 + $0x8] sm:$0xf]
  %v1197 = vld [vmem:[%s21 + $0xc] sm:$0xf]
  %v1198 = vld [vmem:[%s21 + $0x10] sm:$0xf]
  %v1199 = vld [vmem:[%s21 + $0x14] sm:$0xf]
  %v1200 = vld [vmem:[%s21 + $0x18] sm:$0xf]
  %v1201 = vld [vmem:[%s21 + $0x1c] sm:$0xf]
  %v1202 = vld [vmem:[%s21 + $0x20] sm:$0xf]
  %v1203 = vld [vmem:[%s21 + $0x24] sm:$0xf]
  %v1204 = vld [vmem:[%s21 + $0x28] sm:$0xf]
  %v1205 = vld [vmem:[%s21 + $0x2c] sm:$0xf]
  %v1206 = vld [vmem:[%s21 + $0x30] sm:$0xf]
  %v1207 = vld [vmem:[%s21 + $0x34] sm:$0xf]
  %v1208 = vld [vmem:[%s21 + $0x38] sm:$0xf]
  %v1209 = vld [vmem:[%s21 + $0x3c] sm:$0xf]
  %v1210 = vld [vmem:[%s22] sm:$0x1]
  %v1212 = vlaneseq
  %v1213 = vshrl.u32 %v1212, 7
  %v1214 = vsub.s32 0, %v1213
  %v1215 = vrot.slane %v1210, %v1214
  %v1233 = vunpack.c.l.b16 %v1194
  %v1234 = vunpack.c.l.b16 %v1195
  %v1235 = vunpack.c.l.b16 %v1196
  %v1236 = vunpack.c.l.b16 %v1197
  %v1237 = vunpack.c.l.b16 %v1198
  %v1238 = vunpack.c.l.b16 %v1199
  %v1239 = vunpack.c.l.b16 %v1200
  %v1240 = vunpack.c.l.b16 %v1201
  %v1241 = vunpack.c.l.b16 %v1202
  %v1242 = vunpack.c.l.b16 %v1203
  %v1243 = vunpack.c.l.b16 %v1204
  %v1244 = vunpack.c.l.b16 %v1205
  %v1245 = vunpack.c.l.b16 %v1206
  %v1246 = vunpack.c.l.b16 %v1207
  %v1247 = vunpack.c.l.b16 %v1208
  %v1248 = vunpack.c.l.b16 %v1209
  %v1249 = vpack.c.b16 %v1234, %v1233
  %v1250 = vpack.c.b16 %v1236, %v1235
  %v1251 = vpack.c.b16 %v1238, %v1237
  %v1252 = vpack.c.b16 %v1240, %v1239
  %v1253 = vpack.c.b16 %v1242, %v1241
  %v1254 = vpack.c.b16 %v1244, %v1243
  %v1255 = vpack.c.b16 %v1246, %v1245
  %v1256 = vpack.c.b16 %v1248, %v1247
  %1265 = vmatprep.subr.bf16.mxu0 0
  %1266 = vmatpush1.bf16.msra.mxu0 %v1249
  %1267 = vmatprep.subr.bf16.mxu0 0
  %1268 = vmatpush1.bf16.msra.mxu0 %v1250
  %1269 = vmatprep.subr.bf16.mxu0 0
  %1270 = vmatpush1.bf16.msra.mxu0 %v1251
  %1271 = vmatprep.subr.bf16.mxu0 0
  %1272 = vmatpush1.bf16.msra.mxu0 %v1252
  %1273 = vmatprep.subr.bf16.mxu0 0
  %1274 = vmatpush1.bf16.msra.mxu0 %v1253
  %1275 = vmatprep.subr.bf16.mxu0 0
  %1276 = vmatpush1.bf16.msra.mxu0 %v1254
  %1277 = vmatprep.subr.bf16.mxu0 0
  %1278 = vmatpush1.bf16.msra.mxu0 %v1255
  %1279 = vmatprep.subr.bf16.mxu0 0
  %1280 = vmatpush1.bf16.msra.mxu0 %v1256
  %1281 = vmatprep.subr.bf16.mxu0 0
  %1282 = vmatpush1.bf16.msra.mxu0 0
  %1283 = vmatprep.subr.bf16.mxu0 0
  %1284 = vmatpush1.bf16.msra.mxu0 0
  %1285 = vmatprep.subr.bf16.mxu0 0
  %1286 = vmatpush1.bf16.msra.mxu0 0
  %1287 = vmatprep.subr.bf16.mxu0 0
  %1288 = vmatpush1.bf16.msra.mxu0 0
  %1289 = vmatprep.subr.bf16.mxu0 0
  %1290 = vmatpush1.bf16.msra.mxu0 0
  %1291 = vmatprep.subr.bf16.mxu0 0
  %1292 = vmatpush1.bf16.msra.mxu0 0
  %1293 = vmatprep.subr.bf16.mxu0 0
  %1294 = vmatpush1.bf16.msra.mxu0 0
  %1295 = vmatprep.subr.bf16.mxu0 0
  %1296 = vmatpush1.bf16.msra.mxu0 0
  %1297 = vmatprep.mubr.bf16.mxu0 0
  %1298 = vmatmul.mubr.bf16.gmra.mrb[0].mxu0 %v1193
  %v1299 = vpop.f32.mrb[0].mxu0
  %v1300 = vadd.f32 %v1215, %v1299
  %v1301 = vpop.f32.mrb[0].mxu0
  %v1302 = vpop.f32.mrb[0].mxu0
  %v1303 = vpop.f32.mrb[0].mxu0
  %1304 = vdwg.mxu0
  %v1305 = vlaneseq
  %v1306 = vand.u32 %v1305, 127
  %vm1307 = vcmp.lt.s32.totalorder %v1306, 4
  %v1308 = vsel %vm1307, %v1300, -1e+30
  %1309 = vmax.xlane.f32.xlu0 %v1308
  %v1310 = vpop.xlane.xlu0 %1309
  %v1311 = vsub.f32 %v1308, %v1310
  %v1312 = vmul.f32 %v1311, 1.442695
  %v1313 = vpow.pop %v1312
  %1314 = vadd.xlane.f32.xlu0 %v1313
  %v1315 = vpop.xlane.xlu0 %1314
  %v1316 = vlog2.pop %v1315
  %v1317 = vmul.f32 %v1316, 0.6931472
  %v1318 = vsub.f32 %v1311, %v1317
  %1319 = vst [vmem:[%s23] sm:$0xff] %v1318
  // Predicated region
  $region94: #{gcn_with_bn_forward.1} parent=0 // pred_check
    _
  $region95: #{gcn_with_bn_forward.1} parent=0 // pred_check_branch
    %1321 = sbr.rel (0) target = $region97
  $region96: #{gcn_with_bn_forward.1} parent=0 // pred_region
    _
  $region97: #{gcn_with_bn_forward.1} parent=0 // pred_fallthru
    _
  // Predicated region
  $region98: #{gcn_with_bn_forward.1} parent=0 // pred_check
    _
  $region99: #{gcn_with_bn_forward.1} parent=0 // pred_check_branch
    %1323 = sbr.rel (0) target = $region101
  $region100: #{gcn_with_bn_forward.1} parent=0 // pred_region
    _
  $region101: #{gcn_with_bn_forward.1} parent=0 // pred_fallthru
    _

</llo_original>
